<compile_context>
chip_gen: v5e
topology: v5e:2x2
jax: 0.10.0
libtpu: 0.0.40
codegen_flags: <defaults>
</compile_context>

<pallas_src>
import jax
import jax.numpy as jnp
from jax import lax
from jax.experimental import pallas as pl
from jax.experimental.pallas import tpu as pltpu

D_IN, D_H1, D_H2, D_H3 = 28 * 28, 128, 64, 16
NEG_SLOPE = 0.01


def _lrelu(v):
    return jnp.where(v >= 0, v, NEG_SLOPE * v)


def _round_up(n, m):
    return ((n + m - 1) // m) * m


def _pick_tile(B, tb):
    """Pick the batch tile.

    Small batches (<=128 rows) run as one full-array block (no edge handling).
    Larger batches aim for >=4 grid steps (DMA overlap + v7x 2-TC sharding of
    the parallel batch axis) but never shrink the tile below 128 rows.
    """
    if B <= min(tb, 128):
        return B
    cap = max(128, _round_up(pl.cdiv(B, 4), 16))
    return min(tb, _round_up(B, 16), cap)


def dcw_kernel(x_ref, w1t_ref, w2t_ref, m3_ref, w2_ref, w1_ref, o_ref):
    cdt = w1t_ref.dtype  # MXU compute dtype (bf16 by default, f32 optional)
    x = x_ref[...].astype(cdt)  # in-kernel cast: avoids a standalone HBM cast pass
    # encoder
    h = _lrelu(jnp.dot(x, w1t_ref[...], preferred_element_type=jnp.float32))
    h = _lrelu(jnp.dot(h.astype(cdt), w2t_ref[...], preferred_element_type=jnp.float32))
    # fused bottleneck: (h @ W3^T) @ W3 == h @ (W3^T @ W3), no nonlinearity between
    h = _lrelu(jnp.dot(h.astype(cdt), m3_ref[...], preferred_element_type=jnp.float32))
    # decoder (tied weights)
    h = _lrelu(jnp.dot(h.astype(cdt), w2_ref[...], preferred_element_type=jnp.float32))
    y = jnp.dot(h.astype(cdt), w1_ref[...], preferred_element_type=jnp.float32)
    o_ref[...] = y.astype(o_ref.dtype)


def dcw_forward(x, w1, w2, w3, *, tb=512, compute_dtype=jnp.bfloat16, out_dtype=None):
    """x: [B, 784]; w1: [128,784]; w2: [64,128]; w3: [16,64] (PyTorch [out,in])."""
    B, d_in = x.shape
    assert d_in == D_IN
    out_dtype = x.dtype if out_dtype is None else jnp.dtype(out_dtype)
    cdt = compute_dtype

    tb_eff = _pick_tile(B, tb)
    grid = pl.cdiv(B, tb_eff)

    # --- weight prep (tiny; kernel never transposes on-chip) ---
    w1t = w1.T.astype(cdt)                                              # [784,128]
    w2t = w2.T.astype(cdt)                                              # [128, 64]
    m3 = jnp.dot(w3.T, w3, precision=lax.Precision.HIGHEST).astype(cdt)  # [64, 64]
    w2d = w2.astype(cdt)                                                # [64,128]
    w1d = w1.astype(cdt)                                                # [128,784]

    # --- advisory cost hint for XLA scheduling around the custom call ---
    flops = 2 * B * (D_IN * D_H1 + D_H1 * D_H2 + D_H2 * D_H2
                     + D_H2 * D_H1 + D_H1 * D_IN)
    weight_bytes = (w1t.size + w2t.size + m3.size + w2d.size + w1d.size) \
        * jnp.dtype(cdt).itemsize
    bytes_accessed = (B * D_IN * x.dtype.itemsize
                      + B * D_IN * jnp.dtype(out_dtype).itemsize
                      + weight_bytes)
    ce = pl.CostEstimate(flops=int(flops), transcendentals=0,
                         bytes_accessed=int(bytes_accessed))

    rep = lambda shape: pl.BlockSpec(shape, lambda i: (0, 0))  # resident weights
    return pl.pallas_call(
        dcw_kernel,
        out_shape=jax.ShapeDtypeStruct((B, D_IN), out_dtype),
        grid_spec=pltpu.PrefetchScalarGridSpec(
            num_scalar_prefetch=0,
            grid=(grid,),
            in_specs=[
                pl.BlockSpec((tb_eff, D_IN), lambda i: (i, 0)),  # x tile (orig dtype)
                rep((D_IN, D_H1)),     # W1^T
                rep((D_H1, D_H2)),     # W2^T
                rep((D_H2, D_H2)),     # M3 = W3^T @ W3 (fused bottleneck)
                rep((D_H2, D_H1)),     # W2
                rep((D_H1, D_IN)),     # W1 (no column padding; 784 = full dim)
            ],
            out_specs=pl.BlockSpec((tb_eff, D_IN), lambda i: (i, 0)),
        ),
        compiler_params=pltpu.CompilerParams(
            dimension_semantics=("parallel",),
            vmem_limit_bytes=64 << 20,  # headroom for v5e's 16 MiB default at big tiles
        ),
        cost_estimate=ce,
    )(x, w1t, w2t, m3, w2d, w1d)


def _reference(x, w1, w2, w3):
    h = _lrelu(x @ w1.T)
    h = _lrelu(h @ w2.T)
    h = h @ w3.T
    h = _lrelu(h @ w3)
    h = _lrelu(h @ w2)
    return h @ w1


if __name__ == "__main__":
    key = jax.random.PRNGKey(0)
    kx, k1, k2, k3 = jax.random.split(key, 4)

    B = 96
    x = jax.random.normal(kx, (B, D_IN), dtype=jnp.float32)
    # deterministic synthetic weights (PyTorch nn.Linear layout: [out, in])
    w1 = jax.random.normal(k1, (D_H1, D_IN), dtype=jnp.float32) * (1.0 / D_IN) ** 0.5
    w2 = jax.random.normal(k2, (D_H2, D_H1), dtype=jnp.float32) * (1.0 / D_H1) ** 0.5
    w3 = jax.random.normal(k3, (D_H3, D_H2), dtype=jnp.float32) * (1.0 / D_H2) ** 0.5

    y_ref = _reference(x, w1, w2, w3)

    # f32 compute path: tight check of kernel structure (tiling, fusion, specs)
    y32 = jax.block_until_ready(dcw_forward(x, w1, w2, w3, compute_dtype=jnp.float32))
    assert y32.shape == (B, D_IN)
    assert jnp.allclose(y32, y_ref, atol=1e-3, rtol=1e-3), "f32 path mismatch vs reference"

    # default bf16 MXU path (f32 accumulation) -- looser tolerance for bf16 rounding
    ybf = jax.block_until_ready(dcw_forward(x, w1, w2, w3))
    rel = jnp.linalg.norm(ybf.astype(jnp.float32) - y_ref) / jnp.linalg.norm(y_ref)
    assert ybf.shape == (B, D_IN)
    assert rel < 5e-2, f"bf16 path relative error too large: {rel}"

    # multi-block + partial edge block (B not a multiple of the tile)
    B2 = 160
    x2 = jax.random.normal(kx, (B2, D_IN), dtype=jnp.float32)
    y2_ref = _reference(x2, w1, w2, w3)
    y2 = jax.block_until_ready(dcw_forward(x2, w1, w2, w3, tb=128))
    rel2 = jnp.linalg.norm(y2.astype(jnp.float32) - y2_ref) / jnp.linalg.norm(y2_ref)
    assert y2.shape == (B2, D_IN)
    assert rel2 < 5e-2, f"edge-block relative error too large: {rel2}"

    # small ragged batch (single non-multiple-of-tile block)
    y_small = jax.block_until_ready(dcw_forward(x[:40], w1, w2, w3))
    rel_s = (jnp.linalg.norm(y_small.astype(jnp.float32) - y_ref[:40])
             / jnp.linalg.norm(y_ref[:40]))
    assert y_small.shape == (40, D_IN)
    assert rel_s < 5e-2, f"ragged-batch relative error too large: {rel_s}"

    # optional bf16 output (halves output-side HBM traffic when tolerated)
    ybo = jax.block_until_ready(dcw_forward(x, w1, w2, w3, out_dtype=jnp.bfloat16))
    rel_o = (jnp.linalg.norm(ybo.astype(jnp.float32) - y_ref)
             / jnp.linalg.norm(y_ref))
    assert ybo.dtype == jnp.bfloat16 and rel_o < 5e-2, f"bf16-output error too large: {rel_o}"

    print("KERNEL_OK")
</pallas_src>

<mosaic_0001>
module attributes {stable_mosaic.version = 11 : i64} {
  func.func @dcw_kernel(%arg0: i32, %arg1: memref<96x784xf32, #tpu.memory_space<vmem>>, %arg2: memref<784x128xf32, #tpu.memory_space<vmem>>, %arg3: memref<128x64xf32, #tpu.memory_space<vmem>>, %arg4: memref<64x64xf32, #tpu.memory_space<vmem>>, %arg5: memref<64x128xf32, #tpu.memory_space<vmem>>, %arg6: memref<128x784xf32, #tpu.memory_space<vmem>>, %arg7: memref<96x784xf32, #tpu.memory_space<vmem>>) attributes {dimension_semantics = [#tpu.dimension_semantics<parallel>], iteration_bounds = array<i64: 1>, scalar_prefetch = 0 : i64, scratch_operands = 0 : i64, tpu.core_type = #tpu.core_type<tc>, window_params = [{transform_indices = @transform_0, window_bounds = array<i64: 96, 784>}, {pipeline_mode = #tpu.pipeline_mode<synchronous>, transform_indices = @transform_1, window_bounds = array<i64: 784, 128>}, {pipeline_mode = #tpu.pipeline_mode<synchronous>, transform_indices = @transform_2, window_bounds = array<i64: 128, 64>}, {pipeline_mode = #tpu.pipeline_mode<synchronous>, transform_indices = @transform_3, window_bounds = array<i64: 64, 64>}, {pipeline_mode = #tpu.pipeline_mode<synchronous>, transform_indices = @transform_4, window_bounds = array<i64: 64, 128>}, {pipeline_mode = #tpu.pipeline_mode<synchronous>, transform_indices = @transform_5, window_bounds = array<i64: 128, 784>}, {transform_indices = @transform_6, window_bounds = array<i64: 96, 784>}]} {
    %c0 = arith.constant 0 : index
    %c0_0 = arith.constant 0 : index
    %0 = vector.load %arg1[%c0, %c0_0] : memref<96x784xf32, #tpu.memory_space<vmem>>, vector<96x784xf32>
    %c0_1 = arith.constant 0 : index
    %c0_2 = arith.constant 0 : index
    %1 = vector.load %arg2[%c0_1, %c0_2] : memref<784x128xf32, #tpu.memory_space<vmem>>, vector<784x128xf32>
    %cst = arith.constant dense<0.000000e+00> : vector<96x128xf32>
    %2 = tpu.matmul %0, %1, %cst {dimension_numbers = #tpu.dot_dimension_numbers<[1], [0], [0], [1], [0, 0, 1, 1], [], []>} : vector<96x784xf32>, vector<784x128xf32>, vector<96x128xf32> -> vector<96x128xf32>
    %cst_3 = arith.constant 0.000000e+00 : f32
    %3 = vector.broadcast %cst_3 : f32 to vector<96x128xf32>
    %4 = arith.cmpf oge, %2, %3 : vector<96x128xf32>
    %cst_4 = arith.constant 0.00999999977 : f32
    %5 = vector.broadcast %cst_4 : f32 to vector<96x128xf32>
    %6 = arith.mulf %5, %2 : vector<96x128xf32>
    %7 = arith.select %4, %2, %6 : vector<96x128xi1>, vector<96x128xf32>
    %c0_5 = arith.constant 0 : index
    %c0_6 = arith.constant 0 : index
    %8 = vector.load %arg3[%c0_5, %c0_6] : memref<128x64xf32, #tpu.memory_space<vmem>>, vector<128x64xf32>
    %cst_7 = arith.constant dense<0.000000e+00> : vector<96x64xf32>
    %9 = tpu.matmul %7, %8, %cst_7 {dimension_numbers = #tpu.dot_dimension_numbers<[1], [0], [0], [1], [0, 0, 1, 1], [], []>} : vector<96x128xf32>, vector<128x64xf32>, vector<96x64xf32> -> vector<96x64xf32>
    %cst_8 = arith.constant 0.000000e+00 : f32
    %10 = vector.broadcast %cst_8 : f32 to vector<96x64xf32>
    %11 = arith.cmpf oge, %9, %10 : vector<96x64xf32>
    %cst_9 = arith.constant 0.00999999977 : f32
    %12 = vector.broadcast %cst_9 : f32 to vector<96x64xf32>
    %13 = arith.mulf %12, %9 : vector<96x64xf32>
    %14 = arith.select %11, %9, %13 : vector<96x64xi1>, vector<96x64xf32>
    %c0_10 = arith.constant 0 : index
    %c0_11 = arith.constant 0 : index
    %15 = vector.load %arg4[%c0_10, %c0_11] : memref<64x64xf32, #tpu.memory_space<vmem>>, vector<64x64xf32>
    %cst_12 = arith.constant dense<0.000000e+00> : vector<96x64xf32>
    %16 = tpu.matmul %14, %15, %cst_12 {dimension_numbers = #tpu.dot_dimension_numbers<[1], [0], [0], [1], [0, 0, 1, 1], [], []>} : vector<96x64xf32>, vector<64x64xf32>, vector<96x64xf32> -> vector<96x64xf32>
    %cst_13 = arith.constant 0.000000e+00 : f32
    %17 = vector.broadcast %cst_13 : f32 to vector<96x64xf32>
    %18 = arith.cmpf oge, %16, %17 : vector<96x64xf32>
    %cst_14 = arith.constant 0.00999999977 : f32
    %19 = vector.broadcast %cst_14 : f32 to vector<96x64xf32>
    %20 = arith.mulf %19, %16 : vector<96x64xf32>
    %21 = arith.select %18, %16, %20 : vector<96x64xi1>, vector<96x64xf32>
    %c0_15 = arith.constant 0 : index
    %c0_16 = arith.constant 0 : index
    %22 = vector.load %arg5[%c0_15, %c0_16] : memref<64x128xf32, #tpu.memory_space<vmem>>, vector<64x128xf32>
    %cst_17 = arith.constant dense<0.000000e+00> : vector<96x128xf32>
    %23 = tpu.matmul %21, %22, %cst_17 {dimension_numbers = #tpu.dot_dimension_numbers<[1], [0], [0], [1], [0, 0, 1, 1], [], []>} : vector<96x64xf32>, vector<64x128xf32>, vector<96x128xf32> -> vector<96x128xf32>
    %cst_18 = arith.constant 0.000000e+00 : f32
    %24 = vector.broadcast %cst_18 : f32 to vector<96x128xf32>
    %25 = arith.cmpf oge, %23, %24 : vector<96x128xf32>
    %cst_19 = arith.constant 0.00999999977 : f32
    %26 = vector.broadcast %cst_19 : f32 to vector<96x128xf32>
    %27 = arith.mulf %26, %23 : vector<96x128xf32>
    %28 = arith.select %25, %23, %27 : vector<96x128xi1>, vector<96x128xf32>
    %c0_20 = arith.constant 0 : index
    %c0_21 = arith.constant 0 : index
    %29 = vector.load %arg6[%c0_20, %c0_21] : memref<128x784xf32, #tpu.memory_space<vmem>>, vector<128x784xf32>
    %cst_22 = arith.constant dense<0.000000e+00> : vector<96x784xf32>
    %30 = tpu.matmul %28, %29, %cst_22 {dimension_numbers = #tpu.dot_dimension_numbers<[1], [0], [0], [1], [0, 0, 1, 1], [], []>} : vector<96x128xf32>, vector<128x784xf32>, vector<96x784xf32> -> vector<96x784xf32>
    %c0_23 = arith.constant 0 : index
    %c0_24 = arith.constant 0 : index
    %31 = vector.load %arg7[%c0_23, %c0_24] : memref<96x784xf32, #tpu.memory_space<vmem>>, vector<96x784xf32>
    tpu.vector_store %arg7[%c0_23, %c0_24], %30 {strides = array<i32>} : memref<96x784xf32, #tpu.memory_space<vmem>>, vector<96x784xf32>,
    return
  }
  func.func @transform_0(%arg0: i32) -> (i32, i32) {
    %c0_i32 = arith.constant 0 : i32
    %c0_i32_0 = arith.constant 0 : i32
    return %arg0, %c0_i32 : i32, i32
  }
  func.func @transform_1(%arg0: i32) -> (i32, i32) {
    %c0_i32 = arith.constant 0 : i32
    %c0_i32_0 = arith.constant 0 : i32
    %c0_i32_1 = arith.constant 0 : i32
    return %c0_i32, %c0_i32_0 : i32, i32
  }
  func.func @transform_2(%arg0: i32) -> (i32, i32) {
    %c0_i32 = arith.constant 0 : i32
    %c0_i32_0 = arith.constant 0 : i32
    %c0_i32_1 = arith.constant 0 : i32
    return %c0_i32, %c0_i32_0 : i32, i32
  }
  func.func @transform_3(%arg0: i32) -> (i32, i32) {
    %c0_i32 = arith.constant 0 : i32
    %c0_i32_0 = arith.constant 0 : i32
    %c0_i32_1 = arith.constant 0 : i32
    return %c0_i32, %c0_i32_0 : i32, i32
  }
  func.func @transform_4(%arg0: i32) -> (i32, i32) {
    %c0_i32 = arith.constant 0 : i32
    %c0_i32_0 = arith.constant 0 : i32
    %c0_i32_1 = arith.constant 0 : i32
    return %c0_i32, %c0_i32_0 : i32, i32
  }
  func.func @transform_5(%arg0: i32) -> (i32, i32) {
    %c0_i32 = arith.constant 0 : i32
    %c0_i32_0 = arith.constant 0 : i32
    %c0_i32_1 = arith.constant 0 : i32
    return %c0_i32, %c0_i32_0 : i32, i32
  }
  func.func @transform_6(%arg0: i32) -> (i32, i32) {
    %c0_i32 = arith.constant 0 : i32
    %c0_i32_0 = arith.constant 0 : i32
    return %arg0, %c0_i32 : i32, i32
  }
}

</mosaic_0001>

<llo_original>
// kernel: tpu_custom_call.1
$region0: #{tpu_custom_call.1}
  #allocation0 [shape = 'u32[]', space=smem, size = 0x4, offset = 0x4, fixed_abs, tag = 'smem constant byte address 0x4 - core index']
  #allocation1 [shape = 'u32[72,128]{1,0:T(1,128)}', space=vmem, size = 0x9000, scoped, tag = 'internal scratch']
  %s0 = inlined_call_operand.vmem [shape: f32[96,784], index: 0, kind: input, shape index: {}]
  %s1 = inlined_call_operand.vmem [shape: f32[784,128], index: 1, kind: input, shape index: {}]
  %s2 = inlined_call_operand.vmem [shape: f32[128,64], index: 2, kind: input, shape index: {}]
  %s3 = inlined_call_operand.vmem [shape: f32[64,64], index: 3, kind: input, shape index: {}]
  %s4 = inlined_call_operand.vmem [shape: f32[64,128], index: 4, kind: input, shape index: {}]
  %s5 = inlined_call_operand.vmem [shape: f32[128,784], index: 5, kind: input, shape index: {}]
  %s6 = inlined_call_operand.hbm [shape: f32[96,784], index: 6, kind: output, shape index: {}]
  %s7 = sld [smem:[#allocation0]]
  $region34: #{tpu_custom_call.1} parent=0
    _
  %s9 = ssub.s32 1, %s7
  %s10 = scalar_select 0, %s9, %s7
  $region1: #{tpu_custom_call.1} parent=0
    #allocation2 [shape = 'u8[344064]{0}', space=vmem, size = 0x54000, scoped, tag = 'output window, operand 0, single buffered']
    #allocation3 [shape = 's32[1]{0}', space=sflag, size = 0x4, scoped, tag = 'scoped memory for tpu_custom_call.1']
    %11 = vsyncpa [#allocation3], 0
    // Predicated region
    $region2: #{tpu_custom_call.1} parent=1 // pred_check
      _
    $region3: #{tpu_custom_call.1} parent=1 // pred_check_branch
      %13 = sbr.rel (0) target = $region5
    $region4: #{tpu_custom_call.1} parent=1 // pred_region
      _
    $region5: #{tpu_custom_call.1} parent=1 // pred_fallthru
      _
    // Predicated region
    $region6: #{tpu_custom_call.1} parent=1 // pred_check
      _
    $region7: #{tpu_custom_call.1} parent=1 // pred_check_branch
      %15 = sbr.rel (0) target = $region9
    $region8: #{tpu_custom_call.1} parent=1 // pred_region
      _
    $region9: #{tpu_custom_call.1} parent=1 // pred_fallthru
      _
    // Predicated region
    $region10: #{tpu_custom_call.1} parent=1 // pred_check
      _
    $region11: #{tpu_custom_call.1} parent=1 // pred_check_branch
      %17 = sbr.rel (0) target = $region13
    $region12: #{tpu_custom_call.1} parent=1 // pred_region
      _
    $region13: #{tpu_custom_call.1} parent=1 // pred_fallthru
      _
    // Predicated region
    $region14: #{tpu_custom_call.1} parent=1 // pred_check
      _
    $region15: #{tpu_custom_call.1} parent=1 // pred_check_branch
      %19 = sbr.rel (0) target = $region17
    $region16: #{tpu_custom_call.1} parent=1 // pred_region
      _
    $region17: #{tpu_custom_call.1} parent=1 // pred_fallthru
      _
    // Predicated region
    $region18: #{tpu_custom_call.1} parent=1 // pred_check
      _
    $region19: #{tpu_custom_call.1} parent=1 // pred_check_branch
      %21 = sbr.rel (0) target = $region21
    $region20: #{tpu_custom_call.1} parent=1 // pred_region
      _
    $region21: #{tpu_custom_call.1} parent=1 // pred_fallthru
      _
    // Predicated region
    $region22: #{tpu_custom_call.1} parent=1 // pred_check
      _
    $region23: #{tpu_custom_call.1} parent=1 // pred_check_branch
      %23 = sbr.rel (0) target = $region25
    $region24: #{tpu_custom_call.1} parent=1 // pred_region
      _
    $region25: #{tpu_custom_call.1} parent=1 // pred_fallthru
      _
    %v24 = vld [vmem:[%s0] sm:$0xff]
    %v25 = vld [vmem:[%s0 + $0x8] sm:$0xff]
    %v26 = vld [vmem:[%s0 + $0x10] sm:$0xff]
    %v27 = vld [vmem:[%s0 + $0x18] sm:$0xff]
    %v28 = vld [vmem:[%s0 + $0x20] sm:$0xff]
    %v29 = vld [vmem:[%s0 + $0x28] sm:$0xff]
    %v30 = vld [vmem:[%s0 + $0x30] sm:$0xff]
    %v31 = vld [vmem:[%s0 + $0x38] sm:$0xff]
    %v32 = vld [vmem:[%s0 + $0x40] sm:$0xff]
    %v33 = vld [vmem:[%s0 + $0x48] sm:$0xff]
    %v34 = vld [vmem:[%s0 + $0x50] sm:$0xff]
    %v35 = vld [vmem:[%s0 + $0x58] sm:$0xff]
    %v36 = vld [vmem:[%s0 + $0x60] sm:$0xff]
    %v37 = vld [vmem:[%s0 + $0x68] sm:$0xff]
    %v38 = vld [vmem:[%s0 + $0x70] sm:$0xff]
    %v39 = vld [vmem:[%s0 + $0x78] sm:$0xff]
    %v40 = vld [vmem:[%s0 + $0x80] sm:$0xff]
    %v41 = vld [vmem:[%s0 + $0x88] sm:$0xff]
    %v42 = vld [vmem:[%s0 + $0x90] sm:$0xff]
    %v43 = vld [vmem:[%s0 + $0x98] sm:$0xff]
    %v44 = vld [vmem:[%s0 + $0xa0] sm:$0xff]
    %v45 = vld [vmem:[%s0 + $0xa8] sm:$0xff]
    %v46 = vld [vmem:[%s0 + $0xb0] sm:$0xff]
    %v47 = vld [vmem:[%s0 + $0xb8] sm:$0xff]
    %v48 = vld [vmem:[%s0 + $0xc0] sm:$0xff]
    %v49 = vld [vmem:[%s0 + $0xc8] sm:$0xff]
    %v50 = vld [vmem:[%s0 + $0xd0] sm:$0xff]
    %v51 = vld [vmem:[%s0 + $0xd8] sm:$0xff]
    %v52 = vld [vmem:[%s0 + $0xe0] sm:$0xff]
    %v53 = vld [vmem:[%s0 + $0xe8] sm:$0xff]
    %v54 = vld [vmem:[%s0 + $0xf0] sm:$0xff]
    %v55 = vld [vmem:[%s0 + $0xf8] sm:$0xff]
    %v56 = vld [vmem:[%s0 + $0x100] sm:$0xff]
    %v57 = vld [vmem:[%s0 + $0x108] sm:$0xff]
    %v58 = vld [vmem:[%s0 + $0x110] sm:$0xff]
    %v59 = vld [vmem:[%s0 + $0x118] sm:$0xff]
    %v60 = vld [vmem:[%s0 + $0x120] sm:$0xff]
    %v61 = vld [vmem:[%s0 + $0x128] sm:$0xff]
    %v62 = vld [vmem:[%s0 + $0x130] sm:$0xff]
    %v63 = vld [vmem:[%s0 + $0x138] sm:$0xff]
    %v64 = vld [vmem:[%s0 + $0x140] sm:$0xff]
    %v65 = vld [vmem:[%s0 + $0x148] sm:$0xff]
    %v66 = vld [vmem:[%s0 + $0x150] sm:$0xff]
    %v67 = vld [vmem:[%s0 + $0x158] sm:$0xff]
    %v68 = vld [vmem:[%s0 + $0x160] sm:$0xff]
    %v69 = vld [vmem:[%s0 + $0x168] sm:$0xff]
    %v70 = vld [vmem:[%s0 + $0x170] sm:$0xff]
    %v71 = vld [vmem:[%s0 + $0x178] sm:$0xff]
    %v72 = vld [vmem:[%s0 + $0x180] sm:$0xff]
    %v73 = vld [vmem:[%s0 + $0x188] sm:$0xff]
    %v74 = vld [vmem:[%s0 + $0x190] sm:$0xff]
    %v75 = vld [vmem:[%s0 + $0x198] sm:$0xff]
    %v76 = vld [vmem:[%s0 + $0x1a0] sm:$0xff]
    %v77 = vld [vmem:[%s0 + $0x1a8] sm:$0xff]
    %v78 = vld [vmem:[%s0 + $0x1b0] sm:$0xff]
    %v79 = vld [vmem:[%s0 + $0x1b8] sm:$0xff]
    %v80 = vld [vmem:[%s0 + $0x1c0] sm:$0xff]
    %v81 = vld [vmem:[%s0 + $0x1c8] sm:$0xff]
    %v82 = vld [vmem:[%s0 + $0x1d0] sm:$0xff]
    %v83 = vld [vmem:[%s0 + $0x1d8] sm:$0xff]
    %v84 = vld [vmem:[%s0 + $0x1e0] sm:$0xff]
    %v85 = vld [vmem:[%s0 + $0x1e8] sm:$0xff]
    %v86 = vld [vmem:[%s0 + $0x1f0] sm:$0xff]
    %v87 = vld [vmem:[%s0 + $0x1f8] sm:$0xff]
    %v88 = vld [vmem:[%s0 + $0x200] sm:$0xff]
    %v89 = vld [vmem:[%s0 + $0x208] sm:$0xff]
    %v90 = vld [vmem:[%s0 + $0x210] sm:$0xff]
    %v91 = vld [vmem:[%s0 + $0x218] sm:$0xff]
    %v92 = vld [vmem:[%s0 + $0x220] sm:$0xff]
    %v93 = vld [vmem:[%s0 + $0x228] sm:$0xff]
    %v94 = vld [vmem:[%s0 + $0x230] sm:$0xff]
    %v95 = vld [vmem:[%s0 + $0x238] sm:$0xff]
    %v96 = vld [vmem:[%s0 + $0x240] sm:$0xff]
    %v97 = vld [vmem:[%s0 + $0x248] sm:$0xff]
    %v98 = vld [vmem:[%s0 + $0x250] sm:$0xff]
    %v99 = vld [vmem:[%s0 + $0x258] sm:$0xff]
    %v100 = vld [vmem:[%s0 + $0x260] sm:$0xff]
    %v101 = vld [vmem:[%s0 + $0x268] sm:$0xff]
    %v102 = vld [vmem:[%s0 + $0x270] sm:$0xff]
    %v103 = vld [vmem:[%s0 + $0x278] sm:$0xff]
    %v104 = vld [vmem:[%s0 + $0x280] sm:$0xff]
    %v105 = vld [vmem:[%s0 + $0x288] sm:$0xff]
    %v106 = vld [vmem:[%s0 + $0x290] sm:$0xff]
    %v107 = vld [vmem:[%s0 + $0x298] sm:$0xff]
    %v108 = vld [vmem:[%s1] sm:$0xff]
    %v109 = vld [vmem:[%s1 + $0x8] sm:$0xff]
    %v110 = vld [vmem:[%s1 + $0x10] sm:$0xff]
    %v111 = vld [vmem:[%s1 + $0x18] sm:$0xff]
    %v112 = vld [vmem:[%s1 + $0x20] sm:$0xff]
    %v113 = vld [vmem:[%s1 + $0x28] sm:$0xff]
    %v114 = vld [vmem:[%s1 + $0x30] sm:$0xff]
    %v115 = vld [vmem:[%s1 + $0x38] sm:$0xff]
    %v116 = vld [vmem:[%s1 + $0x40] sm:$0xff]
    %v117 = vld [vmem:[%s1 + $0x48] sm:$0xff]
    %v118 = vld [vmem:[%s1 + $0x50] sm:$0xff]
    %v119 = vld [vmem:[%s1 + $0x58] sm:$0xff]
    %v120 = vld [vmem:[%s1 + $0x60] sm:$0xff]
    %v121 = vld [vmem:[%s1 + $0x68] sm:$0xff]
    %v122 = vld [vmem:[%s1 + $0x70] sm:$0xff]
    %v123 = vld [vmem:[%s1 + $0x78] sm:$0xff]
    %v124 = vld [vmem:[%s1 + $0x80] sm:$0xff]
    %v125 = vld [vmem:[%s1 + $0x88] sm:$0xff]
    %v126 = vld [vmem:[%s1 + $0x90] sm:$0xff]
    %v127 = vld [vmem:[%s1 + $0x98] sm:$0xff]
    %v128 = vld [vmem:[%s1 + $0xa0] sm:$0xff]
    %v129 = vld [vmem:[%s1 + $0xa8] sm:$0xff]
    %v130 = vld [vmem:[%s1 + $0xb0] sm:$0xff]
    %v131 = vld [vmem:[%s1 + $0xb8] sm:$0xff]
    %v132 = vld [vmem:[%s1 + $0xc0] sm:$0xff]
    %v133 = vld [vmem:[%s1 + $0xc8] sm:$0xff]
    %v134 = vld [vmem:[%s1 + $0xd0] sm:$0xff]
    %v135 = vld [vmem:[%s1 + $0xd8] sm:$0xff]
    %v136 = vld [vmem:[%s1 + $0xe0] sm:$0xff]
    %v137 = vld [vmem:[%s1 + $0xe8] sm:$0xff]
    %v138 = vld [vmem:[%s1 + $0xf0] sm:$0xff]
    %v139 = vld [vmem:[%s1 + $0xf8] sm:$0xff]
    %v140 = vld [vmem:[%s1 + $0x100] sm:$0xff]
    %v141 = vld [vmem:[%s1 + $0x108] sm:$0xff]
    %v142 = vld [vmem:[%s1 + $0x110] sm:$0xff]
    %v143 = vld [vmem:[%s1 + $0x118] sm:$0xff]
    %v144 = vld [vmem:[%s1 + $0x120] sm:$0xff]
    %v145 = vld [vmem:[%s1 + $0x128] sm:$0xff]
    %v146 = vld [vmem:[%s1 + $0x130] sm:$0xff]
    %v147 = vld [vmem:[%s1 + $0x138] sm:$0xff]
    %v148 = vld [vmem:[%s1 + $0x140] sm:$0xff]
    %v149 = vld [vmem:[%s1 + $0x148] sm:$0xff]
    %v150 = vld [vmem:[%s1 + $0x150] sm:$0xff]
    %v151 = vld [vmem:[%s1 + $0x158] sm:$0xff]
    %v152 = vld [vmem:[%s1 + $0x160] sm:$0xff]
    %v153 = vld [vmem:[%s1 + $0x168] sm:$0xff]
    %v154 = vld [vmem:[%s1 + $0x170] sm:$0xff]
    %v155 = vld [vmem:[%s1 + $0x178] sm:$0xff]
    %v156 = vld [vmem:[%s1 + $0x180] sm:$0xff]
    %v157 = vld [vmem:[%s1 + $0x188] sm:$0xff]
    %v158 = vld [vmem:[%s1 + $0x190] sm:$0xff]
    %v159 = vld [vmem:[%s1 + $0x198] sm:$0xff]
    %v160 = vld [vmem:[%s1 + $0x1a0] sm:$0xff]
    %v161 = vld [vmem:[%s1 + $0x1a8] sm:$0xff]
    %v162 = vld [vmem:[%s1 + $0x1b0] sm:$0xff]
    %v163 = vld [vmem:[%s1 + $0x1b8] sm:$0xff]
    %v164 = vld [vmem:[%s1 + $0x1c0] sm:$0xff]
    %v165 = vld [vmem:[%s1 + $0x1c8] sm:$0xff]
    %v166 = vld [vmem:[%s1 + $0x1d0] sm:$0xff]
    %v167 = vld [vmem:[%s1 + $0x1d8] sm:$0xff]
    %v168 = vld [vmem:[%s1 + $0x1e0] sm:$0xff]
    %v169 = vld [vmem:[%s1 + $0x1e8] sm:$0xff]
    %v170 = vld [vmem:[%s1 + $0x1f0] sm:$0xff]
    %v171 = vld [vmem:[%s1 + $0x1f8] sm:$0xff]
    %v172 = vld [vmem:[%s1 + $0x200] sm:$0xff]
    %v173 = vld [vmem:[%s1 + $0x208] sm:$0xff]
    %v174 = vld [vmem:[%s1 + $0x210] sm:$0xff]
    %v175 = vld [vmem:[%s1 + $0x218] sm:$0xff]
    %v176 = vld [vmem:[%s1 + $0x220] sm:$0xff]
    %v177 = vld [vmem:[%s1 + $0x228] sm:$0xff]
    %v178 = vld [vmem:[%s1 + $0x230] sm:$0xff]
    %v179 = vld [vmem:[%s1 + $0x238] sm:$0xff]
    %v180 = vld [vmem:[%s1 + $0x240] sm:$0xff]
    %v181 = vld [vmem:[%s1 + $0x248] sm:$0xff]
    %v182 = vld [vmem:[%s1 + $0x250] sm:$0xff]
    %v183 = vld [vmem:[%s1 + $0x258] sm:$0xff]
    %v184 = vld [vmem:[%s1 + $0x260] sm:$0xff]
    %v185 = vld [vmem:[%s1 + $0x268] sm:$0xff]
    %v186 = vld [vmem:[%s1 + $0x270] sm:$0xff]
    %v187 = vld [vmem:[%s1 + $0x278] sm:$0xff]
    %v188 = vld [vmem:[%s1 + $0x280] sm:$0xff]
    %v189 = vld [vmem:[%s1 + $0x288] sm:$0xff]
    %v190 = vld [vmem:[%s1 + $0x290] sm:$0xff]
    %v191 = vld [vmem:[%s1 + $0x298] sm:$0xff]
    %v192 = vld [vmem:[%s1 + $0x2a0] sm:$0xff]
    %v193 = vld [vmem:[%s1 + $0x2a8] sm:$0xff]
    %v194 = vld [vmem:[%s1 + $0x2b0] sm:$0xff]
    %v195 = vld [vmem:[%s1 + $0x2b8] sm:$0xff]
    %v196 = vld [vmem:[%s1 + $0x2c0] sm:$0xff]
    %v197 = vld [vmem:[%s1 + $0x2c8] sm:$0xff]
    %v198 = vld [vmem:[%s1 + $0x2d0] sm:$0xff]
    %v199 = vld [vmem:[%s1 + $0x2d8] sm:$0xff]
    %v200 = vld [vmem:[%s1 + $0x2e0] sm:$0xff]
    %v201 = vld [vmem:[%s1 + $0x2e8] sm:$0xff]
    %v202 = vld [vmem:[%s1 + $0x2f0] sm:$0xff]
    %v203 = vld [vmem:[%s1 + $0x2f8] sm:$0xff]
    %v204 = vld [vmem:[%s1 + $0x300] sm:$0xff]
    %v205 = vld [vmem:[%s1 + $0x308] sm:$0xff]
    %vm206 = vcmask 130048
    %v208 = vsel %vm206, %v30, 0
    %v211 = vsel %vm206, %v37, 0
    %v214 = vsel %vm206, %v44, 0
    %v217 = vsel %vm206, %v51, 0
    %v220 = vsel %vm206, %v58, 0
    %v223 = vsel %vm206, %v65, 0
    %v226 = vsel %vm206, %v72, 0
    %v229 = vsel %vm206, %v79, 0
    %v232 = vsel %vm206, %v86, 0
    %v235 = vsel %vm206, %v93, 0
    %v238 = vsel %vm206, %v100, 0
    %v241 = vsel %vm206, %v107, 0
    %243 = vmatpush.msra.mxu0 %v123
    %244 = vmatpush.msra.mxu0 %v122
    %245 = vmatpush.msra.mxu0 %v121
    %246 = vmatpush.msra.mxu0 %v120
    %247 = vmatpush.msra.mxu0 %v119
    %248 = vmatpush.msra.mxu0 %v118
    %249 = vmatpush.msra.mxu0 %v117
    %250 = vmatpush.msra.mxu0 %v116
    %251 = vmatpush.msra.mxu0 %v115
    %252 = vmatpush.msra.mxu0 %v114
    %253 = vmatpush.msra.mxu0 %v113
    %254 = vmatpush.msra.mxu0 %v112
    %255 = vmatpush.msra.mxu0 %v111
    %256 = vmatpush.msra.mxu0 %v110
    %257 = vmatpush.msra.mxu0 %v109
    %258 = vmatpush.msra.mxu0 %v108
    %259 = vmatmul.f32.gmra.mxu0 %v24
    %v260 = vpop.f32.mrf.mxu0
    %v261 = vadd.f32 0.0, %v260
    %262 = vmatmul.f32.gmra.mxu0 %v31
    %v263 = vpop.f32.mrf.mxu0
    %v264 = vadd.f32 0.0, %v263
    %265 = vmatmul.f32.gmra.mxu0 %v38
    %v266 = vpop.f32.mrf.mxu0
    %v267 = vadd.f32 0.0, %v266
    %268 = vmatmul.f32.gmra.mxu0 %v45
    %v269 = vpop.f32.mrf.mxu0
    %v270 = vadd.f32 0.0, %v269
    %271 = vmatmul.f32.gmra.mxu0 %v52
    %v272 = vpop.f32.mrf.mxu0
    %v273 = vadd.f32 0.0, %v272
    %274 = vmatmul.f32.gmra.mxu0 %v59
    %v275 = vpop.f32.mrf.mxu0
    %v276 = vadd.f32 0.0, %v275
    %277 = vmatmul.f32.gmra.mxu0 %v66
    %v278 = vpop.f32.mrf.mxu0
    %v279 = vadd.f32 0.0, %v278
    %280 = vmatmul.f32.gmra.mxu0 %v73
    %v281 = vpop.f32.mrf.mxu0
    %v282 = vadd.f32 0.0, %v281
    %283 = vmatmul.f32.gmra.mxu0 %v80
    %v284 = vpop.f32.mrf.mxu0
    %v285 = vadd.f32 0.0, %v284
    %286 = vmatmul.f32.gmra.mxu0 %v87
    %v287 = vpop.f32.mrf.mxu0
    %v288 = vadd.f32 0.0, %v287
    %289 = vmatmul.f32.gmra.mxu0 %v94
    %v290 = vpop.f32.mrf.mxu0
    %v291 = vadd.f32 0.0, %v290
    %292 = vmatmul.f32.gmra.mxu0 %v101
    %v293 = vpop.f32.mrf.mxu0
    %v294 = vadd.f32 0.0, %v293
    %295 = vdwg.mxu0
    %296 = vmatpush.msra.mxu0 %v139
    %297 = vmatpush.msra.mxu0 %v138
    %298 = vmatpush.msra.mxu0 %v137
    %299 = vmatpush.msra.mxu0 %v136
    %300 = vmatpush.msra.mxu0 %v135
    %301 = vmatpush.msra.mxu0 %v134
    %302 = vmatpush.msra.mxu0 %v133
    %303 = vmatpush.msra.mxu0 %v132
    %304 = vmatpush.msra.mxu0 %v131
    %305 = vmatpush.msra.mxu0 %v130
    %306 = vmatpush.msra.mxu0 %v129
    %307 = vmatpush.msra.mxu0 %v128
    %308 = vmatpush.msra.mxu0 %v127
    %309 = vmatpush.msra.mxu0 %v126
    %310 = vmatpush.msra.mxu0 %v125
    %311 = vmatpush.msra.mxu0 %v124
    %312 = vmatmul.f32.gmra.mxu0 %v25
    %v313 = vpop.f32.mrf.mxu0
    %v314 = vadd.f32 %v261, %v313
    %315 = vmatmul.f32.gmra.mxu0 %v32
    %v316 = vpop.f32.mrf.mxu0
    %v317 = vadd.f32 %v264, %v316
    %318 = vmatmul.f32.gmra.mxu0 %v39
    %v319 = vpop.f32.mrf.mxu0
    %v320 = vadd.f32 %v267, %v319
    %321 = vmatmul.f32.gmra.mxu0 %v46
    %v322 = vpop.f32.mrf.mxu0
    %v323 = vadd.f32 %v270, %v322
    %324 = vmatmul.f32.gmra.mxu0 %v53
    %v325 = vpop.f32.mrf.mxu0
    %v326 = vadd.f32 %v273, %v325
    %327 = vmatmul.f32.gmra.mxu0 %v60
    %v328 = vpop.f32.mrf.mxu0
    %v329 = vadd.f32 %v276, %v328
    %330 = vmatmul.f32.gmra.mxu0 %v67
    %v331 = vpop.f32.mrf.mxu0
    %v332 = vadd.f32 %v279, %v331
    %333 = vmatmul.f32.gmra.mxu0 %v74
    %v334 = vpop.f32.mrf.mxu0
    %v335 = vadd.f32 %v282, %v334
    %336 = vmatmul.f32.gmra.mxu0 %v81
    %v337 = vpop.f32.mrf.mxu0
    %v338 = vadd.f32 %v285, %v337
    %339 = vmatmul.f32.gmra.mxu0 %v88
    %v340 = vpop.f32.mrf.mxu0
    %v341 = vadd.f32 %v288, %v340
    %342 = vmatmul.f32.gmra.mxu0 %v95
    %v343 = vpop.f32.mrf.mxu0
    %v344 = vadd.f32 %v291, %v343
    %345 = vmatmul.f32.gmra.mxu0 %v102
    %v346 = vpop.f32.mrf.mxu0
    %v347 = vadd.f32 %v294, %v346
    %348 = vdwg.mxu0
    %349 = vmatpush.msra.mxu0 %v155
    %350 = vmatpush.msra.mxu0 %v154
    %351 = vmatpush.msra.mxu0 %v153
    %352 = vmatpush.msra.mxu0 %v152
    %353 = vmatpush.msra.mxu0 %v151
    %354 = vmatpush.msra.mxu0 %v150
    %355 = vmatpush.msra.mxu0 %v149
    %356 = vmatpush.msra.mxu0 %v148
    %357 = vmatpush.msra.mxu0 %v147
    %358 = vmatpush.msra.mxu0 %v146
    %359 = vmatpush.msra.mxu0 %v145
    %360 = vmatpush.msra.mxu0 %v144
    %361 = vmatpush.msra.mxu0 %v143
    %362 = vmatpush.msra.mxu0 %v142
    %363 = vmatpush.msra.mxu0 %v141
    %364 = vmatpush.msra.mxu0 %v140
    %365 = vmatmul.f32.gmra.mxu0 %v26
    %v366 = vpop.f32.mrf.mxu0
    %v367 = vadd.f32 %v314, %v366
    %368 = vmatmul.f32.gmra.mxu0 %v33
    %v369 = vpop.f32.mrf.mxu0
    %v370 = vadd.f32 %v317, %v369
    %371 = vmatmul.f32.gmra.mxu0 %v40
    %v372 = vpop.f32.mrf.mxu0
    %v373 = vadd.f32 %v320, %v372
    %374 = vmatmul.f32.gmra.mxu0 %v47
    %v375 = vpop.f32.mrf.mxu0
    %v376 = vadd.f32 %v323, %v375
    %377 = vmatmul.f32.gmra.mxu0 %v54
    %v378 = vpop.f32.mrf.mxu0
    %v379 = vadd.f32 %v326, %v378
    %380 = vmatmul.f32.gmra.mxu0 %v61
    %v381 = vpop.f32.mrf.mxu0
    %v382 = vadd.f32 %v329, %v381
    %383 = vmatmul.f32.gmra.mxu0 %v68
    %v384 = vpop.f32.mrf.mxu0
    %v385 = vadd.f32 %v332, %v384
    %386 = vmatmul.f32.gmra.mxu0 %v75
    %v387 = vpop.f32.mrf.mxu0
    %v388 = vadd.f32 %v335, %v387
    %389 = vmatmul.f32.gmra.mxu0 %v82
    %v390 = vpop.f32.mrf.mxu0
    %v391 = vadd.f32 %v338, %v390
    %392 = vmatmul.f32.gmra.mxu0 %v89
    %v393 = vpop.f32.mrf.mxu0
    %v394 = vadd.f32 %v341, %v393
    %395 = vmatmul.f32.gmra.mxu0 %v96
    %v396 = vpop.f32.mrf.mxu0
    %v397 = vadd.f32 %v344, %v396
    %398 = vmatmul.f32.gmra.mxu0 %v103
    %v399 = vpop.f32.mrf.mxu0
    %v400 = vadd.f32 %v347, %v399
    %401 = vdwg.mxu0
    %402 = vmatpush.msra.mxu0 %v171
    %403 = vmatpush.msra.mxu0 %v170
    %404 = vmatpush.msra.mxu0 %v169
    %405 = vmatpush.msra.mxu0 %v168
    %406 = vmatpush.msra.mxu0 %v167
    %407 = vmatpush.msra.mxu0 %v166
    %408 = vmatpush.msra.mxu0 %v165
    %409 = vmatpush.msra.mxu0 %v164
    %410 = vmatpush.msra.mxu0 %v163
    %411 = vmatpush.msra.mxu0 %v162
    %412 = vmatpush.msra.mxu0 %v161
    %413 = vmatpush.msra.mxu0 %v160
    %414 = vmatpush.msra.mxu0 %v159
    %415 = vmatpush.msra.mxu0 %v158
    %416 = vmatpush.msra.mxu0 %v157
    %417 = vmatpush.msra.mxu0 %v156
    %418 = vmatmul.f32.gmra.mxu0 %v27
    %v419 = vpop.f32.mrf.mxu0
    %v420 = vadd.f32 %v367, %v419
    %421 = vmatmul.f32.gmra.mxu0 %v34
    %v422 = vpop.f32.mrf.mxu0
    %v423 = vadd.f32 %v370, %v422
    %424 = vmatmul.f32.gmra.mxu0 %v41
    %v425 = vpop.f32.mrf.mxu0
    %v426 = vadd.f32 %v373, %v425
    %427 = vmatmul.f32.gmra.mxu0 %v48
    %v428 = vpop.f32.mrf.mxu0
    %v429 = vadd.f32 %v376, %v428
    %430 = vmatmul.f32.gmra.mxu0 %v55
    %v431 = vpop.f32.mrf.mxu0
    %v432 = vadd.f32 %v379, %v431
    %433 = vmatmul.f32.gmra.mxu0 %v62
    %v434 = vpop.f32.mrf.mxu0
    %v435 = vadd.f32 %v382, %v434
    %436 = vmatmul.f32.gmra.mxu0 %v69
    %v437 = vpop.f32.mrf.mxu0
    %v438 = vadd.f32 %v385, %v437
    %439 = vmatmul.f32.gmra.mxu0 %v76
    %v440 = vpop.f32.mrf.mxu0
    %v441 = vadd.f32 %v388, %v440
    %442 = vmatmul.f32.gmra.mxu0 %v83
    %v443 = vpop.f32.mrf.mxu0
    %v444 = vadd.f32 %v391, %v443
    %445 = vmatmul.f32.gmra.mxu0 %v90
    %v446 = vpop.f32.mrf.mxu0
    %v447 = vadd.f32 %v394, %v446
    %448 = vmatmul.f32.gmra.mxu0 %v97
    %v449 = vpop.f32.mrf.mxu0
    %v450 = vadd.f32 %v397, %v449
    %451 = vmatmul.f32.gmra.mxu0 %v104
    %v452 = vpop.f32.mrf.mxu0
    %v453 = vadd.f32 %v400, %v452
    %454 = vdwg.mxu0
    %455 = vmatpush.msra.mxu0 %v187
    %456 = vmatpush.msra.mxu0 %v186
    %457 = vmatpush.msra.mxu0 %v185
    %458 = vmatpush.msra.mxu0 %v184
    %459 = vmatpush.msra.mxu0 %v183
    %460 = vmatpush.msra.mxu0 %v182
    %461 = vmatpush.msra.mxu0 %v181
    %462 = vmatpush.msra.mxu0 %v180
    %463 = vmatpush.msra.mxu0 %v179
    %464 = vmatpush.msra.mxu0 %v178
    %465 = vmatpush.msra.mxu0 %v177
    %466 = vmatpush.msra.mxu0 %v176
    %467 = vmatpush.msra.mxu0 %v175
    %468 = vmatpush.msra.mxu0 %v174
    %469 = vmatpush.msra.mxu0 %v173
    %470 = vmatpush.msra.mxu0 %v172
    %471 = vmatmul.f32.gmra.mxu0 %v28
    %v472 = vpop.f32.mrf.mxu0
    %v473 = vadd.f32 %v420, %v472
    %474 = vmatmul.f32.gmra.mxu0 %v35
    %v475 = vpop.f32.mrf.mxu0
    %v476 = vadd.f32 %v423, %v475
    %477 = vmatmul.f32.gmra.mxu0 %v42
    %v478 = vpop.f32.mrf.mxu0
    %v479 = vadd.f32 %v426, %v478
    %480 = vmatmul.f32.gmra.mxu0 %v49
    %v481 = vpop.f32.mrf.mxu0
    %v482 = vadd.f32 %v429, %v481
    %483 = vmatmul.f32.gmra.mxu0 %v56
    %v484 = vpop.f32.mrf.mxu0
    %v485 = vadd.f32 %v432, %v484
    %486 = vmatmul.f32.gmra.mxu0 %v63
    %v487 = vpop.f32.mrf.mxu0
    %v488 = vadd.f32 %v435, %v487
    %489 = vmatmul.f32.gmra.mxu0 %v70
    %v490 = vpop.f32.mrf.mxu0
    %v491 = vadd.f32 %v438, %v490
    %492 = vmatmul.f32.gmra.mxu0 %v77
    %v493 = vpop.f32.mrf.mxu0
    %v494 = vadd.f32 %v441, %v493
    %495 = vmatmul.f32.gmra.mxu0 %v84
    %v496 = vpop.f32.mrf.mxu0
    %v497 = vadd.f32 %v444, %v496
    %498 = vmatmul.f32.gmra.mxu0 %v91
    %v499 = vpop.f32.mrf.mxu0
    %v500 = vadd.f32 %v447, %v499
    %501 = vmatmul.f32.gmra.mxu0 %v98
    %v502 = vpop.f32.mrf.mxu0
    %v503 = vadd.f32 %v450, %v502
    %504 = vmatmul.f32.gmra.mxu0 %v105
    %v505 = vpop.f32.mrf.mxu0
    %v506 = vadd.f32 %v453, %v505
    %507 = vdwg.mxu0
    %508 = vmatpush.msra.mxu0 %v203
    %509 = vmatpush.msra.mxu0 %v202
    %510 = vmatpush.msra.mxu0 %v201
    %511 = vmatpush.msra.mxu0 %v200
    %512 = vmatpush.msra.mxu0 %v199
    %513 = vmatpush.msra.mxu0 %v198
    %514 = vmatpush.msra.mxu0 %v197
    %515 = vmatpush.msra.mxu0 %v196
    %516 = vmatpush.msra.mxu0 %v195
    %517 = vmatpush.msra.mxu0 %v194
    %518 = vmatpush.msra.mxu0 %v193
    %519 = vmatpush.msra.mxu0 %v192
    %520 = vmatpush.msra.mxu0 %v191
    %521 = vmatpush.msra.mxu0 %v190
    %522 = vmatpush.msra.mxu0 %v189
    %523 = vmatpush.msra.mxu0 %v188
    %524 = vmatmul.f32.gmra.mxu0 %v29
    %v525 = vpop.f32.mrf.mxu0
    %v526 = vadd.f32 %v473, %v525
    %527 = vmatmul.f32.gmra.mxu0 %v36
    %v528 = vpop.f32.mrf.mxu0
    %v529 = vadd.f32 %v476, %v528
    %530 = vmatmul.f32.gmra.mxu0 %v43
    %v531 = vpop.f32.mrf.mxu0
    %v532 = vadd.f32 %v479, %v531
    %533 = vmatmul.f32.gmra.mxu0 %v50
    %v534 = vpop.f32.mrf.mxu0
    %v535 = vadd.f32 %v482, %v534
    %536 = vmatmul.f32.gmra.mxu0 %v57
    %v537 = vpop.f32.mrf.mxu0
    %v538 = vadd.f32 %v485, %v537
    %539 = vmatmul.f32.gmra.mxu0 %v64
    %v540 = vpop.f32.mrf.mxu0
    %v541 = vadd.f32 %v488, %v540
    %542 = vmatmul.f32.gmra.mxu0 %v71
    %v543 = vpop.f32.mrf.mxu0
    %v544 = vadd.f32 %v491, %v543
    %545 = vmatmul.f32.gmra.mxu0 %v78
    %v546 = vpop.f32.mrf.mxu0
    %v547 = vadd.f32 %v494, %v546
    %548 = vmatmul.f32.gmra.mxu0 %v85
    %v549 = vpop.f32.mrf.mxu0
    %v550 = vadd.f32 %v497, %v549
    %551 = vmatmul.f32.gmra.mxu0 %v92
    %v552 = vpop.f32.mrf.mxu0
    %v553 = vadd.f32 %v500, %v552
    %554 = vmatmul.f32.gmra.mxu0 %v99
    %v555 = vpop.f32.mrf.mxu0
    %v556 = vadd.f32 %v503, %v555
    %557 = vmatmul.f32.gmra.mxu0 %v106
    %v558 = vpop.f32.mrf.mxu0
    %v559 = vadd.f32 %v506, %v558
    %560 = vdwg.mxu0
    %561 = vmatpush.msra.mxu0 0.0
    %562 = vmatpush.msra.mxu0 0.0
    %563 = vmatpush.msra.mxu0 0.0
    %564 = vmatpush.msra.mxu0 0.0
    %565 = vmatpush.msra.mxu0 0.0
    %566 = vmatpush.msra.mxu0 0.0
    %567 = vmatpush.msra.mxu0 0.0
    %568 = vmatpush.msra.mxu0 0.0
    %569 = vmatpush.msra.mxu0 0.0
    %570 = vmatpush.msra.mxu0 0.0
    %571 = vmatpush.msra.mxu0 0.0
    %572 = vmatpush.msra.mxu0 0.0
    %573 = vmatpush.msra.mxu0 0.0
    %574 = vmatpush.msra.mxu0 0.0
    %575 = vmatpush.msra.mxu0 %v205
    %576 = vmatpush.msra.mxu0 %v204
    %577 = vmatmul.f32.gmra.mxu0 %v208
    %v578 = vpop.f32.mrf.mxu0
    %v579 = vadd.f32 %v526, %v578
    %580 = vmatmul.f32.gmra.mxu0 %v211
    %v581 = vpop.f32.mrf.mxu0
    %v582 = vadd.f32 %v529, %v581
    %583 = vmatmul.f32.gmra.mxu0 %v214
    %v584 = vpop.f32.mrf.mxu0
    %v585 = vadd.f32 %v532, %v584
    %586 = vmatmul.f32.gmra.mxu0 %v217
    %v587 = vpop.f32.mrf.mxu0
    %v588 = vadd.f32 %v535, %v587
    %589 = vmatmul.f32.gmra.mxu0 %v220
    %v590 = vpop.f32.mrf.mxu0
    %v591 = vadd.f32 %v538, %v590
    %592 = vmatmul.f32.gmra.mxu0 %v223
    %v593 = vpop.f32.mrf.mxu0
    %v594 = vadd.f32 %v541, %v593
    %595 = vmatmul.f32.gmra.mxu0 %v226
    %v596 = vpop.f32.mrf.mxu0
    %v597 = vadd.f32 %v544, %v596
    %598 = vmatmul.f32.gmra.mxu0 %v229
    %v599 = vpop.f32.mrf.mxu0
    %v600 = vadd.f32 %v547, %v599
    %601 = vmatmul.f32.gmra.mxu0 %v232
    %v602 = vpop.f32.mrf.mxu0
    %v603 = vadd.f32 %v550, %v602
    %604 = vmatmul.f32.gmra.mxu0 %v235
    %v605 = vpop.f32.mrf.mxu0
    %v606 = vadd.f32 %v553, %v605
    %607 = vmatmul.f32.gmra.mxu0 %v238
    %v608 = vpop.f32.mrf.mxu0
    %v609 = vadd.f32 %v556, %v608
    %610 = vmatmul.f32.gmra.mxu0 %v241
    %v611 = vpop.f32.mrf.mxu0
    %v612 = vadd.f32 %v559, %v611
    %613 = vdwg.mxu0
    %vm614 = vcmp.ge.f32.partialorder %v579, 0.0
    %vm615 = vcmp.ge.f32.partialorder %v582, 0.0
    %vm616 = vcmp.ge.f32.partialorder %v585, 0.0
    %vm617 = vcmp.ge.f32.partialorder %v588, 0.0
    %vm618 = vcmp.ge.f32.partialorder %v591, 0.0
    %vm619 = vcmp.ge.f32.partialorder %v594, 0.0
    %vm620 = vcmp.ge.f32.partialorder %v597, 0.0
    %vm621 = vcmp.ge.f32.partialorder %v600, 0.0
    %vm622 = vcmp.ge.f32.partialorder %v603, 0.0
    %vm623 = vcmp.ge.f32.partialorder %v606, 0.0
    %vm624 = vcmp.ge.f32.partialorder %v609, 0.0
    %vm625 = vcmp.ge.f32.partialorder %v612, 0.0
    %v626 = vmul.f32 %v579, 0.01
    %v627 = vmul.f32 %v582, 0.01
    %v628 = vmul.f32 %v585, 0.01
    %v629 = vmul.f32 %v588, 0.01
    %v630 = vmul.f32 %v591, 0.01
    %v631 = vmul.f32 %v594, 0.01
    %v632 = vmul.f32 %v597, 0.01
    %v633 = vmul.f32 %v600, 0.01
    %v634 = vmul.f32 %v603, 0.01
    %v635 = vmul.f32 %v606, 0.01
    %v636 = vmul.f32 %v609, 0.01
    %v637 = vmul.f32 %v612, 0.01
    %v638 = vsel %vm614, %v579, %v626
    %v639 = vsel %vm615, %v582, %v627
    %v640 = vsel %vm616, %v585, %v628
    %v641 = vsel %vm617, %v588, %v629
    %v642 = vsel %vm618, %v591, %v630
    %v643 = vsel %vm619, %v594, %v631
    %v644 = vsel %vm620, %v597, %v632
    %v645 = vsel %vm621, %v600, %v633
    %v646 = vsel %vm622, %v603, %v634
    %v647 = vsel %vm623, %v606, %v635
    %v648 = vsel %vm624, %v609, %v636
    %v649 = vsel %vm625, %v612, %v637
    %v650 = vld [vmem:[%s2] sm:$0xff]
    %v651 = vld [vmem:[%s2 + $0x8] sm:$0xff]
    %v652 = vld [vmem:[%s2 + $0x10] sm:$0xff]
    %v653 = vld [vmem:[%s2 + $0x18] sm:$0xff]
    %v654 = vld [vmem:[%s2 + $0x20] sm:$0xff]
    %v655 = vld [vmem:[%s2 + $0x28] sm:$0xff]
    %v656 = vld [vmem:[%s2 + $0x30] sm:$0xff]
    %v657 = vld [vmem:[%s2 + $0x38] sm:$0xff]
    %v658 = vld [vmem:[%s2 + $0x40] sm:$0xff]
    %v659 = vld [vmem:[%s2 + $0x48] sm:$0xff]
    %v660 = vld [vmem:[%s2 + $0x50] sm:$0xff]
    %v661 = vld [vmem:[%s2 + $0x58] sm:$0xff]
    %v662 = vld [vmem:[%s2 + $0x60] sm:$0xff]
    %v663 = vld [vmem:[%s2 + $0x68] sm:$0xff]
    %v664 = vld [vmem:[%s2 + $0x70] sm:$0xff]
    %v665 = vld [vmem:[%s2 + $0x78] sm:$0xff]
    %666 = vmatpush.msra.mxu0 %v665
    %667 = vmatpush.msra.mxu0 %v664
    %668 = vmatpush.msra.mxu0 %v663
    %669 = vmatpush.msra.mxu0 %v662
    %670 = vmatpush.msra.mxu0 %v661
    %671 = vmatpush.msra.mxu0 %v660
    %672 = vmatpush.msra.mxu0 %v659
    %673 = vmatpush.msra.mxu0 %v658
    %674 = vmatpush.msra.mxu0 %v657
    %675 = vmatpush.msra.mxu0 %v656
    %676 = vmatpush.msra.mxu0 %v655
    %677 = vmatpush.msra.mxu0 %v654
    %678 = vmatpush.msra.mxu0 %v653
    %679 = vmatpush.msra.mxu0 %v652
    %680 = vmatpush.msra.mxu0 %v651
    %681 = vmatpush.msra.mxu0 %v650
    %682 = vmatmul.f32.gmra.mxu0 %v638
    %v683 = vpop.f32.mrf.mxu0
    %v684 = vadd.f32 0.0, %v683
    %685 = vmatmul.f32.gmra.mxu0 %v639
    %v686 = vpop.f32.mrf.mxu0
    %v687 = vadd.f32 0.0, %v686
    %688 = vmatmul.f32.gmra.mxu0 %v640
    %v689 = vpop.f32.mrf.mxu0
    %v690 = vadd.f32 0.0, %v689
    %691 = vmatmul.f32.gmra.mxu0 %v641
    %v692 = vpop.f32.mrf.mxu0
    %v693 = vadd.f32 0.0, %v692
    %694 = vmatmul.f32.gmra.mxu0 %v642
    %v695 = vpop.f32.mrf.mxu0
    %v696 = vadd.f32 0.0, %v695
    %697 = vmatmul.f32.gmra.mxu0 %v643
    %v698 = vpop.f32.mrf.mxu0
    %v699 = vadd.f32 0.0, %v698
    %700 = vmatmul.f32.gmra.mxu0 %v644
    %v701 = vpop.f32.mrf.mxu0
    %v702 = vadd.f32 0.0, %v701
    %703 = vmatmul.f32.gmra.mxu0 %v645
    %v704 = vpop.f32.mrf.mxu0
    %v705 = vadd.f32 0.0, %v704
    %706 = vmatmul.f32.gmra.mxu0 %v646
    %v707 = vpop.f32.mrf.mxu0
    %v708 = vadd.f32 0.0, %v707
    %709 = vmatmul.f32.gmra.mxu0 %v647
    %v710 = vpop.f32.mrf.mxu0
    %v711 = vadd.f32 0.0, %v710
    %712 = vmatmul.f32.gmra.mxu0 %v648
    %v713 = vpop.f32.mrf.mxu0
    %v714 = vadd.f32 0.0, %v713
    %715 = vmatmul.f32.gmra.mxu0 %v649
    %v716 = vpop.f32.mrf.mxu0
    %v717 = vadd.f32 0.0, %v716
    %718 = vdwg.mxu0
    %vm719 = vcmp.ge.f32.partialorder %v684, 0.0
    %vm720 = vcmp.ge.f32.partialorder %v687, 0.0
    %vm721 = vcmp.ge.f32.partialorder %v690, 0.0
    %vm722 = vcmp.ge.f32.partialorder %v693, 0.0
    %vm723 = vcmp.ge.f32.partialorder %v696, 0.0
    %vm724 = vcmp.ge.f32.partialorder %v699, 0.0
    %vm725 = vcmp.ge.f32.partialorder %v702, 0.0
    %vm726 = vcmp.ge.f32.partialorder %v705, 0.0
    %vm727 = vcmp.ge.f32.partialorder %v708, 0.0
    %vm728 = vcmp.ge.f32.partialorder %v711, 0.0
    %vm729 = vcmp.ge.f32.partialorder %v714, 0.0
    %vm730 = vcmp.ge.f32.partialorder %v717, 0.0
    %v731 = vmul.f32 %v684, 0.01
    %v732 = vmul.f32 %v687, 0.01
    %v733 = vmul.f32 %v690, 0.01
    %v734 = vmul.f32 %v693, 0.01
    %v735 = vmul.f32 %v696, 0.01
    %v736 = vmul.f32 %v699, 0.01
    %v737 = vmul.f32 %v702, 0.01
    %v738 = vmul.f32 %v705, 0.01
    %v739 = vmul.f32 %v708, 0.01
    %v740 = vmul.f32 %v711, 0.01
    %v741 = vmul.f32 %v714, 0.01
    %v742 = vmul.f32 %v717, 0.01
    %v743 = vsel %vm719, %v684, %v731
    %v744 = vsel %vm720, %v687, %v732
    %v745 = vsel %vm721, %v690, %v733
    %v746 = vsel %vm722, %v693, %v734
    %v747 = vsel %vm723, %v696, %v735
    %v748 = vsel %vm724, %v699, %v736
    %v749 = vsel %vm725, %v702, %v737
    %v750 = vsel %vm726, %v705, %v738
    %v751 = vsel %vm727, %v708, %v739
    %v752 = vsel %vm728, %v711, %v740
    %v753 = vsel %vm729, %v714, %v741
    %v754 = vsel %vm730, %v717, %v742
    %v755 = vld [vmem:[%s3] sm:$0xff]
    %v756 = vld [vmem:[%s3 + $0x8] sm:$0xff]
    %v757 = vld [vmem:[%s3 + $0x10] sm:$0xff]
    %v758 = vld [vmem:[%s3 + $0x18] sm:$0xff]
    %v759 = vld [vmem:[%s3 + $0x20] sm:$0xff]
    %v760 = vld [vmem:[%s3 + $0x28] sm:$0xff]
    %v761 = vld [vmem:[%s3 + $0x30] sm:$0xff]
    %v762 = vld [vmem:[%s3 + $0x38] sm:$0xff]
    %vm763 = vcmask 523264
    %v765 = vsel %vm763, %v743, 0
    %v768 = vsel %vm763, %v744, 0
    %v771 = vsel %vm763, %v745, 0
    %v774 = vsel %vm763, %v746, 0
    %v777 = vsel %vm763, %v747, 0
    %v780 = vsel %vm763, %v748, 0
    %v783 = vsel %vm763, %v749, 0
    %v786 = vsel %vm763, %v750, 0
    %v789 = vsel %vm763, %v751, 0
    %v792 = vsel %vm763, %v752, 0
    %v795 = vsel %vm763, %v753, 0
    %v798 = vsel %vm763, %v754, 0
    %800 = vmatpush.msra.mxu0 0.0
    %801 = vmatpush.msra.mxu0 0.0
    %802 = vmatpush.msra.mxu0 0.0
    %803 = vmatpush.msra.mxu0 0.0
    %804 = vmatpush.msra.mxu0 0.0
    %805 = vmatpush.msra.mxu0 0.0
    %806 = vmatpush.msra.mxu0 0.0
    %807 = vmatpush.msra.mxu0 0.0
    %808 = vmatpush.msra.mxu0 %v762
    %809 = vmatpush.msra.mxu0 %v761
    %810 = vmatpush.msra.mxu0 %v760
    %811 = vmatpush.msra.mxu0 %v759
    %812 = vmatpush.msra.mxu0 %v758
    %813 = vmatpush.msra.mxu0 %v757
    %814 = vmatpush.msra.mxu0 %v756
    %815 = vmatpush.msra.mxu0 %v755
    %816 = vmatmul.f32.gmra.mxu0 %v765
    %v817 = vpop.f32.mrf.mxu0
    %v818 = vadd.f32 0.0, %v817
    %819 = vmatmul.f32.gmra.mxu0 %v768
    %v820 = vpop.f32.mrf.mxu0
    %v821 = vadd.f32 0.0, %v820
    %822 = vmatmul.f32.gmra.mxu0 %v771
    %v823 = vpop.f32.mrf.mxu0
    %v824 = vadd.f32 0.0, %v823
    %825 = vmatmul.f32.gmra.mxu0 %v774
    %v826 = vpop.f32.mrf.mxu0
    %v827 = vadd.f32 0.0, %v826
    %828 = vmatmul.f32.gmra.mxu0 %v777
    %v829 = vpop.f32.mrf.mxu0
    %v830 = vadd.f32 0.0, %v829
    %831 = vmatmul.f32.gmra.mxu0 %v780
    %v832 = vpop.f32.mrf.mxu0
    %v833 = vadd.f32 0.0, %v832
    %834 = vmatmul.f32.gmra.mxu0 %v783
    %v835 = vpop.f32.mrf.mxu0
    %v836 = vadd.f32 0.0, %v835
    %837 = vmatmul.f32.gmra.mxu0 %v786
    %v838 = vpop.f32.mrf.mxu0
    %v839 = vadd.f32 0.0, %v838
    %840 = vmatmul.f32.gmra.mxu0 %v789
    %v841 = vpop.f32.mrf.mxu0
    %v842 = vadd.f32 0.0, %v841
    %843 = vmatmul.f32.gmra.mxu0 %v792
    %v844 = vpop.f32.mrf.mxu0
    %v845 = vadd.f32 0.0, %v844
    %846 = vmatmul.f32.gmra.mxu0 %v795
    %v847 = vpop.f32.mrf.mxu0
    %v848 = vadd.f32 0.0, %v847
    %849 = vmatmul.f32.gmra.mxu0 %v798
    %v850 = vpop.f32.mrf.mxu0
    %v851 = vadd.f32 0.0, %v850
    %852 = vdwg.mxu0
    %vm853 = vcmp.ge.f32.partialorder %v818, 0.0
    %vm854 = vcmp.ge.f32.partialorder %v821, 0.0
    %vm855 = vcmp.ge.f32.partialorder %v824, 0.0
    %vm856 = vcmp.ge.f32.partialorder %v827, 0.0
    %vm857 = vcmp.ge.f32.partialorder %v830, 0.0
    %vm858 = vcmp.ge.f32.partialorder %v833, 0.0
    %vm859 = vcmp.ge.f32.partialorder %v836, 0.0
    %vm860 = vcmp.ge.f32.partialorder %v839, 0.0
    %vm861 = vcmp.ge.f32.partialorder %v842, 0.0
    %vm862 = vcmp.ge.f32.partialorder %v845, 0.0
    %vm863 = vcmp.ge.f32.partialorder %v848, 0.0
    %vm864 = vcmp.ge.f32.partialorder %v851, 0.0
    %v865 = vmul.f32 %v818, 0.01
    %v866 = vmul.f32 %v821, 0.01
    %v867 = vmul.f32 %v824, 0.01
    %v868 = vmul.f32 %v827, 0.01
    %v869 = vmul.f32 %v830, 0.01
    %v870 = vmul.f32 %v833, 0.01
    %v871 = vmul.f32 %v836, 0.01
    %v872 = vmul.f32 %v839, 0.01
    %v873 = vmul.f32 %v842, 0.01
    %v874 = vmul.f32 %v845, 0.01
    %v875 = vmul.f32 %v848, 0.01
    %v876 = vmul.f32 %v851, 0.01
    %v877 = vsel %vm853, %v818, %v865
    %v878 = vsel %vm854, %v821, %v866
    %v879 = vsel %vm855, %v824, %v867
    %v880 = vsel %vm856, %v827, %v868
    %v881 = vsel %vm857, %v830, %v869
    %v882 = vsel %vm858, %v833, %v870
    %v883 = vsel %vm859, %v836, %v871
    %v884 = vsel %vm860, %v839, %v872
    %v885 = vsel %vm861, %v842, %v873
    %v886 = vsel %vm862, %v845, %v874
    %v887 = vsel %vm863, %v848, %v875
    %v888 = vsel %vm864, %v851, %v876
    %v889 = vld [vmem:[%s4] sm:$0xff]
    %v890 = vld [vmem:[%s4 + $0x8] sm:$0xff]
    %v891 = vld [vmem:[%s4 + $0x10] sm:$0xff]
    %v892 = vld [vmem:[%s4 + $0x18] sm:$0xff]
    %v893 = vld [vmem:[%s4 + $0x20] sm:$0xff]
    %v894 = vld [vmem:[%s4 + $0x28] sm:$0xff]
    %v895 = vld [vmem:[%s4 + $0x30] sm:$0xff]
    %v896 = vld [vmem:[%s4 + $0x38] sm:$0xff]
    %v898 = vsel %vm763, %v877, 0
    %v901 = vsel %vm763, %v878, 0
    %v904 = vsel %vm763, %v879, 0
    %v907 = vsel %vm763, %v880, 0
    %v910 = vsel %vm763, %v881, 0
    %v913 = vsel %vm763, %v882, 0
    %v916 = vsel %vm763, %v883, 0
    %v919 = vsel %vm763, %v884, 0
    %v922 = vsel %vm763, %v885, 0
    %v925 = vsel %vm763, %v886, 0
    %v928 = vsel %vm763, %v887, 0
    %v931 = vsel %vm763, %v888, 0
    %933 = vmatpush.msra.mxu0 0.0
    %934 = vmatpush.msra.mxu0 0.0
    %935 = vmatpush.msra.mxu0 0.0
    %936 = vmatpush.msra.mxu0 0.0
    %937 = vmatpush.msra.mxu0 0.0
    %938 = vmatpush.msra.mxu0 0.0
    %939 = vmatpush.msra.mxu0 0.0
    %940 = vmatpush.msra.mxu0 0.0
    %941 = vmatpush.msra.mxu0 %v896
    %942 = vmatpush.msra.mxu0 %v895
    %943 = vmatpush.msra.mxu0 %v894
    %944 = vmatpush.msra.mxu0 %v893
    %945 = vmatpush.msra.mxu0 %v892
    %946 = vmatpush.msra.mxu0 %v891
    %947 = vmatpush.msra.mxu0 %v890
    %948 = vmatpush.msra.mxu0 %v889
    %949 = vmatmul.f32.gmra.mxu0 %v898
    %v950 = vpop.f32.mrf.mxu0
    %v951 = vadd.f32 0.0, %v950
    %952 = vmatmul.f32.gmra.mxu0 %v901
    %v953 = vpop.f32.mrf.mxu0
    %v954 = vadd.f32 0.0, %v953
    %955 = vmatmul.f32.gmra.mxu0 %v904
    %v956 = vpop.f32.mrf.mxu0
    %v957 = vadd.f32 0.0, %v956
    %958 = vmatmul.f32.gmra.mxu0 %v907
    %v959 = vpop.f32.mrf.mxu0
    %v960 = vadd.f32 0.0, %v959
    %961 = vmatmul.f32.gmra.mxu0 %v910
    %v962 = vpop.f32.mrf.mxu0
    %v963 = vadd.f32 0.0, %v962
    %964 = vmatmul.f32.gmra.mxu0 %v913
    %v965 = vpop.f32.mrf.mxu0
    %v966 = vadd.f32 0.0, %v965
    %967 = vmatmul.f32.gmra.mxu0 %v916
    %v968 = vpop.f32.mrf.mxu0
    %v969 = vadd.f32 0.0, %v968
    %970 = vmatmul.f32.gmra.mxu0 %v919
    %v971 = vpop.f32.mrf.mxu0
    %v972 = vadd.f32 0.0, %v971
    %973 = vmatmul.f32.gmra.mxu0 %v922
    %v974 = vpop.f32.mrf.mxu0
    %v975 = vadd.f32 0.0, %v974
    %976 = vmatmul.f32.gmra.mxu0 %v925
    %v977 = vpop.f32.mrf.mxu0
    %v978 = vadd.f32 0.0, %v977
    %979 = vmatmul.f32.gmra.mxu0 %v928
    %v980 = vpop.f32.mrf.mxu0
    %v981 = vadd.f32 0.0, %v980
    %982 = vmatmul.f32.gmra.mxu0 %v931
    %v983 = vpop.f32.mrf.mxu0
    %v984 = vadd.f32 0.0, %v983
    %985 = vdwg.mxu0
    %vm986 = vcmp.ge.f32.partialorder %v951, 0.0
    %vm987 = vcmp.ge.f32.partialorder %v954, 0.0
    %vm988 = vcmp.ge.f32.partialorder %v957, 0.0
    %vm989 = vcmp.ge.f32.partialorder %v960, 0.0
    %vm990 = vcmp.ge.f32.partialorder %v963, 0.0
    %vm991 = vcmp.ge.f32.partialorder %v966, 0.0
    %vm992 = vcmp.ge.f32.partialorder %v969, 0.0
    %vm993 = vcmp.ge.f32.partialorder %v972, 0.0
    %vm994 = vcmp.ge.f32.partialorder %v975, 0.0
    %vm995 = vcmp.ge.f32.partialorder %v978, 0.0
    %vm996 = vcmp.ge.f32.partialorder %v981, 0.0
    %vm997 = vcmp.ge.f32.partialorder %v984, 0.0
    %v998 = vmul.f32 %v951, 0.01
    %v999 = vmul.f32 %v954, 0.01
    %v1000 = vmul.f32 %v957, 0.01
    %v1001 = vmul.f32 %v960, 0.01
    %v1002 = vmul.f32 %v963, 0.01
    %v1003 = vmul.f32 %v966, 0.01
    %v1004 = vmul.f32 %v969, 0.01
    %v1005 = vmul.f32 %v972, 0.01
    %v1006 = vmul.f32 %v975, 0.01
    %v1007 = vmul.f32 %v978, 0.01
    %v1008 = vmul.f32 %v981, 0.01
    %v1009 = vmul.f32 %v984, 0.01
    %v1010 = vsel %vm986, %v951, %v998
    %v1011 = vsel %vm987, %v954, %v999
    %v1012 = vsel %vm988, %v957, %v1000
    %v1013 = vsel %vm989, %v960, %v1001
    %v1014 = vsel %vm990, %v963, %v1002
    %v1015 = vsel %vm991, %v966, %v1003
    %v1016 = vsel %vm992, %v969, %v1004
    %v1017 = vsel %vm993, %v972, %v1005
    %v1018 = vsel %vm994, %v975, %v1006
    %v1019 = vsel %vm995, %v978, %v1007
    %v1020 = vsel %vm996, %v981, %v1008
    %v1021 = vsel %vm997, %v984, %v1009
    %v1022 = vld [vmem:[%s5] sm:$0xff]
    %v1023 = vld [vmem:[%s5 + $0x8] sm:$0xff]
    %v1024 = vld [vmem:[%s5 + $0x10] sm:$0xff]
    %v1025 = vld [vmem:[%s5 + $0x18] sm:$0xff]
    %v1026 = vld [vmem:[%s5 + $0x20] sm:$0xff]
    %v1027 = vld [vmem:[%s5 + $0x28] sm:$0xff]
    %v1028 = vld [vmem:[%s5 + $0x30] sm:$0xff]
    %v1029 = vld [vmem:[%s5 + $0x38] sm:$0xff]
    %v1030 = vld [vmem:[%s5 + $0x40] sm:$0xff]
    %v1031 = vld [vmem:[%s5 + $0x48] sm:$0xff]
    %v1032 = vld [vmem:[%s5 + $0x50] sm:$0xff]
    %v1033 = vld [vmem:[%s5 + $0x58] sm:$0xff]
    %v1034 = vld [vmem:[%s5 + $0x60] sm:$0xff]
    %v1035 = vld [vmem:[%s5 + $0x68] sm:$0xff]
    %v1036 = vld [vmem:[%s5 + $0x70] sm:$0xff]
    %v1037 = vld [vmem:[%s5 + $0x78] sm:$0xff]
    %v1038 = vld [vmem:[%s5 + $0x80] sm:$0xff]
    %v1039 = vld [vmem:[%s5 + $0x88] sm:$0xff]
    %v1040 = vld [vmem:[%s5 + $0x90] sm:$0xff]
    %v1041 = vld [vmem:[%s5 + $0x98] sm:$0xff]
    %v1042 = vld [vmem:[%s5 + $0xa0] sm:$0xff]
    %v1043 = vld [vmem:[%s5 + $0xa8] sm:$0xff]
    %v1044 = vld [vmem:[%s5 + $0xb0] sm:$0xff]
    %v1045 = vld [vmem:[%s5 + $0xb8] sm:$0xff]
    %v1046 = vld [vmem:[%s5 + $0xc0] sm:$0xff]
    %v1047 = vld [vmem:[%s5 + $0xc8] sm:$0xff]
    %v1048 = vld [vmem:[%s5 + $0xd0] sm:$0xff]
    %v1049 = vld [vmem:[%s5 + $0xd8] sm:$0xff]
    %v1050 = vld [vmem:[%s5 + $0xe0] sm:$0xff]
    %v1051 = vld [vmem:[%s5 + $0xe8] sm:$0xff]
    %v1052 = vld [vmem:[%s5 + $0xf0] sm:$0xff]
    %v1053 = vld [vmem:[%s5 + $0xf8] sm:$0xff]
    %v1054 = vld [vmem:[%s5 + $0x100] sm:$0xff]
    %v1055 = vld [vmem:[%s5 + $0x108] sm:$0xff]
    %v1056 = vld [vmem:[%s5 + $0x110] sm:$0xff]
    %v1057 = vld [vmem:[%s5 + $0x118] sm:$0xff]
    %v1058 = vld [vmem:[%s5 + $0x120] sm:$0xff]
    %v1059 = vld [vmem:[%s5 + $0x128] sm:$0xff]
    %v1060 = vld [vmem:[%s5 + $0x130] sm:$0xff]
    %v1061 = vld [vmem:[%s5 + $0x138] sm:$0xff]
    %v1062 = vld [vmem:[%s5 + $0x140] sm:$0xff]
    %v1063 = vld [vmem:[%s5 + $0x148] sm:$0xff]
    %v1064 = vld [vmem:[%s5 + $0x150] sm:$0xff]
    %v1065 = vld [vmem:[%s5 + $0x158] sm:$0xff]
    %v1066 = vld [vmem:[%s5 + $0x160] sm:$0xff]
    %v1067 = vld [vmem:[%s5 + $0x168] sm:$0xff]
    %v1068 = vld [vmem:[%s5 + $0x170] sm:$0xff]
    %v1069 = vld [vmem:[%s5 + $0x178] sm:$0xff]
    %v1070 = vld [vmem:[%s5 + $0x180] sm:$0xff]
    %v1071 = vld [vmem:[%s5 + $0x188] sm:$0xff]
    %v1072 = vld [vmem:[%s5 + $0x190] sm:$0xff]
    %v1073 = vld [vmem:[%s5 + $0x198] sm:$0xff]
    %v1074 = vld [vmem:[%s5 + $0x1a0] sm:$0xff]
    %v1075 = vld [vmem:[%s5 + $0x1a8] sm:$0xff]
    %v1076 = vld [vmem:[%s5 + $0x1b0] sm:$0xff]
    %v1077 = vld [vmem:[%s5 + $0x1b8] sm:$0xff]
    %v1078 = vld [vmem:[%s5 + $0x1c0] sm:$0xff]
    %v1079 = vld [vmem:[%s5 + $0x1c8] sm:$0xff]
    %v1080 = vld [vmem:[%s5 + $0x1d0] sm:$0xff]
    %v1081 = vld [vmem:[%s5 + $0x1d8] sm:$0xff]
    %v1082 = vld [vmem:[%s5 + $0x1e0] sm:$0xff]
    %v1083 = vld [vmem:[%s5 + $0x1e8] sm:$0xff]
    %v1084 = vld [vmem:[%s5 + $0x1f0] sm:$0xff]
    %v1085 = vld [vmem:[%s5 + $0x1f8] sm:$0xff]
    %v1086 = vld [vmem:[%s5 + $0x200] sm:$0xff]
    %v1087 = vld [vmem:[%s5 + $0x208] sm:$0xff]
    %v1088 = vld [vmem:[%s5 + $0x210] sm:$0xff]
    %v1089 = vld [vmem:[%s5 + $0x218] sm:$0xff]
    %v1090 = vld [vmem:[%s5 + $0x220] sm:$0xff]
    %v1091 = vld [vmem:[%s5 + $0x228] sm:$0xff]
    %v1092 = vld [vmem:[%s5 + $0x230] sm:$0xff]
    %v1093 = vld [vmem:[%s5 + $0x238] sm:$0xff]
    %v1094 = vld [vmem:[%s5 + $0x240] sm:$0xff]
    %v1095 = vld [vmem:[%s5 + $0x248] sm:$0xff]
    %v1096 = vld [vmem:[%s5 + $0x250] sm:$0xff]
    %v1097 = vld [vmem:[%s5 + $0x258] sm:$0xff]
    %v1098 = vld [vmem:[%s5 + $0x260] sm:$0xff]
    %v1099 = vld [vmem:[%s5 + $0x268] sm:$0xff]
    %v1100 = vld [vmem:[%s5 + $0x270] sm:$0xff]
    %v1101 = vld [vmem:[%s5 + $0x278] sm:$0xff]
    %v1102 = vld [vmem:[%s5 + $0x280] sm:$0xff]
    %v1103 = vld [vmem:[%s5 + $0x288] sm:$0xff]
    %v1104 = vld [vmem:[%s5 + $0x290] sm:$0xff]
    %v1105 = vld [vmem:[%s5 + $0x298] sm:$0xff]
    %v1106 = vld [vmem:[%s5 + $0x2a0] sm:$0xff]
    %v1107 = vld [vmem:[%s5 + $0x2a8] sm:$0xff]
    %v1108 = vld [vmem:[%s5 + $0x2b0] sm:$0xff]
    %v1109 = vld [vmem:[%s5 + $0x2b8] sm:$0xff]
    %v1110 = vld [vmem:[%s5 + $0x2c0] sm:$0xff]
    %v1111 = vld [vmem:[%s5 + $0x2c8] sm:$0xff]
    %v1112 = vld [vmem:[%s5 + $0x2d0] sm:$0xff]
    %v1113 = vld [vmem:[%s5 + $0x2d8] sm:$0xff]
    %v1114 = vld [vmem:[%s5 + $0x2e0] sm:$0xff]
    %v1115 = vld [vmem:[%s5 + $0x2e8] sm:$0xff]
    %v1116 = vld [vmem:[%s5 + $0x2f0] sm:$0xff]
    %v1117 = vld [vmem:[%s5 + $0x2f8] sm:$0xff]
    %v1118 = vld [vmem:[%s5 + $0x300] sm:$0xff]
    %v1119 = vld [vmem:[%s5 + $0x308] sm:$0xff]
    %v1120 = vld [vmem:[%s5 + $0x310] sm:$0xff]
    %v1121 = vld [vmem:[%s5 + $0x318] sm:$0xff]
    %v1122 = vld [vmem:[%s5 + $0x320] sm:$0xff]
    %v1123 = vld [vmem:[%s5 + $0x328] sm:$0xff]
    %v1124 = vld [vmem:[%s5 + $0x330] sm:$0xff]
    %v1125 = vld [vmem:[%s5 + $0x338] sm:$0xff]
    %v1126 = vld [vmem:[%s5 + $0x340] sm:$0xff]
    %v1127 = vld [vmem:[%s5 + $0x348] sm:$0xff]
    %v1128 = vld [vmem:[%s5 + $0x350] sm:$0xff]
    %v1129 = vld [vmem:[%s5 + $0x358] sm:$0xff]
    %v1130 = vld [vmem:[%s5 + $0x360] sm:$0xff]
    %v1131 = vld [vmem:[%s5 + $0x368] sm:$0xff]
    %v1132 = vld [vmem:[%s5 + $0x370] sm:$0xff]
    %v1133 = vld [vmem:[%s5 + $0x378] sm:$0xff]
    %1134 = vmatpush.msra.mxu0 %v1127
    %1135 = vmatpush.msra.mxu0 %v1120
    %1136 = vmatpush.msra.mxu0 %v1113
    %1137 = vmatpush.msra.mxu0 %v1106
    %1138 = vmatpush.msra.mxu0 %v1099
    %1139 = vmatpush.msra.mxu0 %v1092
    %1140 = vmatpush.msra.mxu0 %v1085
    %1141 = vmatpush.msra.mxu0 %v1078
    %1142 = vmatpush.msra.mxu0 %v1071
    %1143 = vmatpush.msra.mxu0 %v1064
    %1144 = vmatpush.msra.mxu0 %v1057
    %1145 = vmatpush.msra.mxu0 %v1050
    %1146 = vmatpush.msra.mxu0 %v1043
    %1147 = vmatpush.msra.mxu0 %v1036
    %1148 = vmatpush.msra.mxu0 %v1029
    %1149 = vmatpush.msra.mxu0 %v1022
    %1150 = vmatmul.f32.gmra.mxu0 %v1010
    %v1151 = vpop.f32.mrf.mxu0
    %v1152 = vadd.f32 0.0, %v1151
    %1153 = vmatmul.f32.gmra.mxu0 %v1011
    %v1154 = vpop.f32.mrf.mxu0
    %v1155 = vadd.f32 0.0, %v1154
    %1156 = vmatmul.f32.gmra.mxu0 %v1012
    %v1157 = vpop.f32.mrf.mxu0
    %v1158 = vadd.f32 0.0, %v1157
    %1159 = vmatmul.f32.gmra.mxu0 %v1013
    %v1160 = vpop.f32.mrf.mxu0
    %v1161 = vadd.f32 0.0, %v1160
    %1162 = vmatmul.f32.gmra.mxu0 %v1014
    %v1163 = vpop.f32.mrf.mxu0
    %v1164 = vadd.f32 0.0, %v1163
    %1165 = vmatmul.f32.gmra.mxu0 %v1015
    %v1166 = vpop.f32.mrf.mxu0
    %v1167 = vadd.f32 0.0, %v1166
    %1168 = vmatmul.f32.gmra.mxu0 %v1016
    %v1169 = vpop.f32.mrf.mxu0
    %v1170 = vadd.f32 0.0, %v1169
    %1171 = vmatmul.f32.gmra.mxu0 %v1017
    %v1172 = vpop.f32.mrf.mxu0
    %v1173 = vadd.f32 0.0, %v1172
    %1174 = vmatmul.f32.gmra.mxu0 %v1018
    %v1175 = vpop.f32.mrf.mxu0
    %v1176 = vadd.f32 0.0, %v1175
    %1177 = vmatmul.f32.gmra.mxu0 %v1019
    %v1178 = vpop.f32.mrf.mxu0
    %v1179 = vadd.f32 0.0, %v1178
    %1180 = vmatmul.f32.gmra.mxu0 %v1020
    %v1181 = vpop.f32.mrf.mxu0
    %v1182 = vadd.f32 0.0, %v1181
    %1183 = vmatmul.f32.gmra.mxu0 %v1021
    %v1184 = vpop.f32.mrf.mxu0
    %v1185 = vadd.f32 0.0, %v1184
    %1186 = vdwg.mxu0
    %1187 = vmatpush.msra.mxu0 %v1128
    %1188 = vmatpush.msra.mxu0 %v1121
    %1189 = vmatpush.msra.mxu0 %v1114
    %1190 = vmatpush.msra.mxu0 %v1107
    %1191 = vmatpush.msra.mxu0 %v1100
    %1192 = vmatpush.msra.mxu0 %v1093
    %1193 = vmatpush.msra.mxu0 %v1086
    %1194 = vmatpush.msra.mxu0 %v1079
    %1195 = vmatpush.msra.mxu0 %v1072
    %1196 = vmatpush.msra.mxu0 %v1065
    %1197 = vmatpush.msra.mxu0 %v1058
    %1198 = vmatpush.msra.mxu0 %v1051
    %1199 = vmatpush.msra.mxu0 %v1044
    %1200 = vmatpush.msra.mxu0 %v1037
    %1201 = vmatpush.msra.mxu0 %v1030
    %1202 = vmatpush.msra.mxu0 %v1023
    %1203 = vmatmul.f32.gmra.mxu0 %v1010
    %v1204 = vpop.f32.mrf.mxu0
    %v1205 = vadd.f32 0.0, %v1204
    %1206 = vmatmul.f32.gmra.mxu0 %v1011
    %v1207 = vpop.f32.mrf.mxu0
    %v1208 = vadd.f32 0.0, %v1207
    %1209 = vmatmul.f32.gmra.mxu0 %v1012
    %v1210 = vpop.f32.mrf.mxu0
    %v1211 = vadd.f32 0.0, %v1210
    %1212 = vmatmul.f32.gmra.mxu0 %v1013
    %v1213 = vpop.f32.mrf.mxu0
    %v1214 = vadd.f32 0.0, %v1213
    %1215 = vmatmul.f32.gmra.mxu0 %v1014
    %v1216 = vpop.f32.mrf.mxu0
    %v1217 = vadd.f32 0.0, %v1216
    %1218 = vmatmul.f32.gmra.mxu0 %v1015
    %v1219 = vpop.f32.mrf.mxu0
    %v1220 = vadd.f32 0.0, %v1219
    %1221 = vmatmul.f32.gmra.mxu0 %v1016
    %v1222 = vpop.f32.mrf.mxu0
    %v1223 = vadd.f32 0.0, %v1222
    %1224 = vmatmul.f32.gmra.mxu0 %v1017
    %v1225 = vpop.f32.mrf.mxu0
    %v1226 = vadd.f32 0.0, %v1225
    %1227 = vmatmul.f32.gmra.mxu0 %v1018
    %v1228 = vpop.f32.mrf.mxu0
    %v1229 = vadd.f32 0.0, %v1228
    %1230 = vmatmul.f32.gmra.mxu0 %v1019
    %v1231 = vpop.f32.mrf.mxu0
    %v1232 = vadd.f32 0.0, %v1231
    %1233 = vmatmul.f32.gmra.mxu0 %v1020
    %v1234 = vpop.f32.mrf.mxu0
    %v1235 = vadd.f32 0.0, %v1234
    %1236 = vmatmul.f32.gmra.mxu0 %v1021
    %v1237 = vpop.f32.mrf.mxu0
    %v1238 = vadd.f32 0.0, %v1237
    %1239 = vdwg.mxu0
    %1240 = vmatpush.msra.mxu0 %v1129
    %1241 = vmatpush.msra.mxu0 %v1122
    %1242 = vmatpush.msra.mxu0 %v1115
    %1243 = vmatpush.msra.mxu0 %v1108
    %1244 = vmatpush.msra.mxu0 %v1101
    %1245 = vmatpush.msra.mxu0 %v1094
    %1246 = vmatpush.msra.mxu0 %v1087
    %1247 = vmatpush.msra.mxu0 %v1080
    %1248 = vmatpush.msra.mxu0 %v1073
    %1249 = vmatpush.msra.mxu0 %v1066
    %1250 = vmatpush.msra.mxu0 %v1059
    %1251 = vmatpush.msra.mxu0 %v1052
    %1252 = vmatpush.msra.mxu0 %v1045
    %1253 = vmatpush.msra.mxu0 %v1038
    %1254 = vmatpush.msra.mxu0 %v1031
    %1255 = vmatpush.msra.mxu0 %v1024
    %1256 = vmatmul.f32.gmra.mxu0 %v1010
    %v1257 = vpop.f32.mrf.mxu0
    %v1258 = vadd.f32 0.0, %v1257
    %1259 = vmatmul.f32.gmra.mxu0 %v1011
    %v1260 = vpop.f32.mrf.mxu0
    %v1261 = vadd.f32 0.0, %v1260
    %1262 = vmatmul.f32.gmra.mxu0 %v1012
    %v1263 = vpop.f32.mrf.mxu0
    %v1264 = vadd.f32 0.0, %v1263
    %1265 = vmatmul.f32.gmra.mxu0 %v1013
    %v1266 = vpop.f32.mrf.mxu0
    %v1267 = vadd.f32 0.0, %v1266
    %1268 = vmatmul.f32.gmra.mxu0 %v1014
    %v1269 = vpop.f32.mrf.mxu0
    %v1270 = vadd.f32 0.0, %v1269
    %1271 = vmatmul.f32.gmra.mxu0 %v1015
    %v1272 = vpop.f32.mrf.mxu0
    %v1273 = vadd.f32 0.0, %v1272
    %1274 = vmatmul.f32.gmra.mxu0 %v1016
    %v1275 = vpop.f32.mrf.mxu0
    %v1276 = vadd.f32 0.0, %v1275
    %1277 = vmatmul.f32.gmra.mxu0 %v1017
    %v1278 = vpop.f32.mrf.mxu0
    %v1279 = vadd.f32 0.0, %v1278
    %1280 = vmatmul.f32.gmra.mxu0 %v1018
    %v1281 = vpop.f32.mrf.mxu0
    %v1282 = vadd.f32 0.0, %v1281
    %1283 = vmatmul.f32.gmra.mxu0 %v1019
    %v1284 = vpop.f32.mrf.mxu0
    %v1285 = vadd.f32 0.0, %v1284
    %1286 = vmatmul.f32.gmra.mxu0 %v1020
    %v1287 = vpop.f32.mrf.mxu0
    %v1288 = vadd.f32 0.0, %v1287
    %1289 = vmatmul.f32.gmra.mxu0 %v1021
    %v1290 = vpop.f32.mrf.mxu0
    %v1291 = vadd.f32 0.0, %v1290
    %1292 = vdwg.mxu0
    %1293 = vmatpush.msra.mxu0 %v1130
    %1294 = vmatpush.msra.mxu0 %v1123
    %1295 = vmatpush.msra.mxu0 %v1116
    %1296 = vmatpush.msra.mxu0 %v1109
    %1297 = vmatpush.msra.mxu0 %v1102
    %1298 = vmatpush.msra.mxu0 %v1095
    %1299 = vmatpush.msra.mxu0 %v1088
    %1300 = vmatpush.msra.mxu0 %v1081
    %1301 = vmatpush.msra.mxu0 %v1074
    %1302 = vmatpush.msra.mxu0 %v1067
    %1303 = vmatpush.msra.mxu0 %v1060
    %1304 = vmatpush.msra.mxu0 %v1053
    %1305 = vmatpush.msra.mxu0 %v1046
    %1306 = vmatpush.msra.mxu0 %v1039
    %1307 = vmatpush.msra.mxu0 %v1032
    %1308 = vmatpush.msra.mxu0 %v1025
    %1309 = vmatmul.f32.gmra.mxu0 %v1010
    %v1310 = vpop.f32.mrf.mxu0
    %v1311 = vadd.f32 0.0, %v1310
    %1312 = vmatmul.f32.gmra.mxu0 %v1011
    %v1313 = vpop.f32.mrf.mxu0
    %v1314 = vadd.f32 0.0, %v1313
    %1315 = vmatmul.f32.gmra.mxu0 %v1012
    %v1316 = vpop.f32.mrf.mxu0
    %v1317 = vadd.f32 0.0, %v1316
    %1318 = vmatmul.f32.gmra.mxu0 %v1013
    %v1319 = vpop.f32.mrf.mxu0
    %v1320 = vadd.f32 0.0, %v1319
    %1321 = vmatmul.f32.gmra.mxu0 %v1014
    %v1322 = vpop.f32.mrf.mxu0
    %v1323 = vadd.f32 0.0, %v1322
    %1324 = vmatmul.f32.gmra.mxu0 %v1015
    %v1325 = vpop.f32.mrf.mxu0
    %v1326 = vadd.f32 0.0, %v1325
    %1327 = vmatmul.f32.gmra.mxu0 %v1016
    %v1328 = vpop.f32.mrf.mxu0
    %v1329 = vadd.f32 0.0, %v1328
    %1330 = vmatmul.f32.gmra.mxu0 %v1017
    %v1331 = vpop.f32.mrf.mxu0
    %v1332 = vadd.f32 0.0, %v1331
    %1333 = vmatmul.f32.gmra.mxu0 %v1018
    %v1334 = vpop.f32.mrf.mxu0
    %v1335 = vadd.f32 0.0, %v1334
    %1336 = vmatmul.f32.gmra.mxu0 %v1019
    %v1337 = vpop.f32.mrf.mxu0
    %v1338 = vadd.f32 0.0, %v1337
    %1339 = vmatmul.f32.gmra.mxu0 %v1020
    %v1340 = vpop.f32.mrf.mxu0
    %v1341 = vadd.f32 0.0, %v1340
    %1342 = vmatmul.f32.gmra.mxu0 %v1021
    %v1343 = vpop.f32.mrf.mxu0
    %v1344 = vadd.f32 0.0, %v1343
    %1345 = vdwg.mxu0
    %1346 = vmatpush.msra.mxu0 %v1131
    %1347 = vmatpush.msra.mxu0 %v1124
    %1348 = vmatpush.msra.mxu0 %v1117
    %1349 = vmatpush.msra.mxu0 %v1110
    %1350 = vmatpush.msra.mxu0 %v1103
    %1351 = vmatpush.msra.mxu0 %v1096
    %1352 = vmatpush.msra.mxu0 %v1089
    %1353 = vmatpush.msra.mxu0 %v1082
    %1354 = vmatpush.msra.mxu0 %v1075
    %1355 = vmatpush.msra.mxu0 %v1068
    %1356 = vmatpush.msra.mxu0 %v1061
    %1357 = vmatpush.msra.mxu0 %v1054
    %1358 = vmatpush.msra.mxu0 %v1047
    %1359 = vmatpush.msra.mxu0 %v1040
    %1360 = vmatpush.msra.mxu0 %v1033
    %1361 = vmatpush.msra.mxu0 %v1026
    %1362 = vmatmul.f32.gmra.mxu0 %v1010
    %v1363 = vpop.f32.mrf.mxu0
    %v1364 = vadd.f32 0.0, %v1363
    %1365 = vmatmul.f32.gmra.mxu0 %v1011
    %v1366 = vpop.f32.mrf.mxu0
    %v1367 = vadd.f32 0.0, %v1366
    %1368 = vmatmul.f32.gmra.mxu0 %v1012
    %v1369 = vpop.f32.mrf.mxu0
    %v1370 = vadd.f32 0.0, %v1369
    %1371 = vmatmul.f32.gmra.mxu0 %v1013
    %v1372 = vpop.f32.mrf.mxu0
    %v1373 = vadd.f32 0.0, %v1372
    %1374 = vmatmul.f32.gmra.mxu0 %v1014
    %v1375 = vpop.f32.mrf.mxu0
    %v1376 = vadd.f32 0.0, %v1375
    %1377 = vmatmul.f32.gmra.mxu0 %v1015
    %v1378 = vpop.f32.mrf.mxu0
    %v1379 = vadd.f32 0.0, %v1378
    %1380 = vmatmul.f32.gmra.mxu0 %v1016
    %v1381 = vpop.f32.mrf.mxu0
    %v1382 = vadd.f32 0.0, %v1381
    %1383 = vmatmul.f32.gmra.mxu0 %v1017
    %v1384 = vpop.f32.mrf.mxu0
    %v1385 = vadd.f32 0.0, %v1384
    %1386 = vmatmul.f32.gmra.mxu0 %v1018
    %v1387 = vpop.f32.mrf.mxu0
    %v1388 = vadd.f32 0.0, %v1387
    %1389 = vmatmul.f32.gmra.mxu0 %v1019
    %v1390 = vpop.f32.mrf.mxu0
    %v1391 = vadd.f32 0.0, %v1390
    %1392 = vmatmul.f32.gmra.mxu0 %v1020
    %v1393 = vpop.f32.mrf.mxu0
    %v1394 = vadd.f32 0.0, %v1393
    %1395 = vmatmul.f32.gmra.mxu0 %v1021
    %v1396 = vpop.f32.mrf.mxu0
    %v1397 = vadd.f32 0.0, %v1396
    %1398 = vdwg.mxu0
    %1399 = vmatpush.msra.mxu0 %v1132
    %1400 = vmatpush.msra.mxu0 %v1125
    %1401 = vmatpush.msra.mxu0 %v1118
    %1402 = vmatpush.msra.mxu0 %v1111
    %1403 = vmatpush.msra.mxu0 %v1104
    %1404 = vmatpush.msra.mxu0 %v1097
    %1405 = vmatpush.msra.mxu0 %v1090
    %1406 = vmatpush.msra.mxu0 %v1083
    %1407 = vmatpush.msra.mxu0 %v1076
    %1408 = vmatpush.msra.mxu0 %v1069
    %1409 = vmatpush.msra.mxu0 %v1062
    %1410 = vmatpush.msra.mxu0 %v1055
    %1411 = vmatpush.msra.mxu0 %v1048
    %1412 = vmatpush.msra.mxu0 %v1041
    %1413 = vmatpush.msra.mxu0 %v1034
    %1414 = vmatpush.msra.mxu0 %v1027
    %1415 = vmatmul.f32.gmra.mxu0 %v1010
    %v1416 = vpop.f32.mrf.mxu0
    %v1417 = vadd.f32 0.0, %v1416
    %1418 = vmatmul.f32.gmra.mxu0 %v1011
    %v1419 = vpop.f32.mrf.mxu0
    %v1420 = vadd.f32 0.0, %v1419
    %1421 = vmatmul.f32.gmra.mxu0 %v1012
    %v1422 = vpop.f32.mrf.mxu0
    %v1423 = vadd.f32 0.0, %v1422
    %1424 = vmatmul.f32.gmra.mxu0 %v1013
    %v1425 = vpop.f32.mrf.mxu0
    %v1426 = vadd.f32 0.0, %v1425
    %1427 = vmatmul.f32.gmra.mxu0 %v1014
    %v1428 = vpop.f32.mrf.mxu0
    %v1429 = vadd.f32 0.0, %v1428
    %1430 = vmatmul.f32.gmra.mxu0 %v1015
    %v1431 = vpop.f32.mrf.mxu0
    %v1432 = vadd.f32 0.0, %v1431
    %1433 = vmatmul.f32.gmra.mxu0 %v1016
    %v1434 = vpop.f32.mrf.mxu0
    %v1435 = vadd.f32 0.0, %v1434
    %1436 = vmatmul.f32.gmra.mxu0 %v1017
    %v1437 = vpop.f32.mrf.mxu0
    %v1438 = vadd.f32 0.0, %v1437
    %1439 = vmatmul.f32.gmra.mxu0 %v1018
    %v1440 = vpop.f32.mrf.mxu0
    %v1441 = vadd.f32 0.0, %v1440
    %1442 = vmatmul.f32.gmra.mxu0 %v1019
    %v1443 = vpop.f32.mrf.mxu0
    %v1444 = vadd.f32 0.0, %v1443
    %1445 = vmatmul.f32.gmra.mxu0 %v1020
    %v1446 = vpop.f32.mrf.mxu0
    %v1447 = vadd.f32 0.0, %v1446
    %1448 = vmatmul.f32.gmra.mxu0 %v1021
    %v1449 = vpop.f32.mrf.mxu0
    %v1450 = vadd.f32 0.0, %v1449
    %1451 = vdwg.mxu0
    %1452 = vmatpush.msra.mxu0 %v1133
    %1453 = vmatpush.msra.mxu0 %v1126
    %1454 = vmatpush.msra.mxu0 %v1119
    %1455 = vmatpush.msra.mxu0 %v1112
    %1456 = vmatpush.msra.mxu0 %v1105
    %1457 = vmatpush.msra.mxu0 %v1098
    %1458 = vmatpush.msra.mxu0 %v1091
    %1459 = vmatpush.msra.mxu0 %v1084
    %1460 = vmatpush.msra.mxu0 %v1077
    %1461 = vmatpush.msra.mxu0 %v1070
    %1462 = vmatpush.msra.mxu0 %v1063
    %1463 = vmatpush.msra.mxu0 %v1056
    %1464 = vmatpush.msra.mxu0 %v1049
    %1465 = vmatpush.msra.mxu0 %v1042
    %1466 = vmatpush.msra.mxu0 %v1035
    %1467 = vmatpush.msra.mxu0 %v1028
    %1468 = vmatmul.f32.gmra.mxu0 %v1010
    %v1469 = vpop.f32.mrf.mxu0
    %v1470 = vadd.f32 0.0, %v1469
    %1471 = vmatmul.f32.gmra.mxu0 %v1011
    %v1472 = vpop.f32.mrf.mxu0
    %v1473 = vadd.f32 0.0, %v1472
    %1474 = vmatmul.f32.gmra.mxu0 %v1012
    %v1475 = vpop.f32.mrf.mxu0
    %v1476 = vadd.f32 0.0, %v1475
    %1477 = vmatmul.f32.gmra.mxu0 %v1013
    %v1478 = vpop.f32.mrf.mxu0
    %v1479 = vadd.f32 0.0, %v1478
    %1480 = vmatmul.f32.gmra.mxu0 %v1014
    %v1481 = vpop.f32.mrf.mxu0
    %v1482 = vadd.f32 0.0, %v1481
    %1483 = vmatmul.f32.gmra.mxu0 %v1015
    %v1484 = vpop.f32.mrf.mxu0
    %v1485 = vadd.f32 0.0, %v1484
    %1486 = vmatmul.f32.gmra.mxu0 %v1016
    %v1487 = vpop.f32.mrf.mxu0
    %v1488 = vadd.f32 0.0, %v1487
    %1489 = vmatmul.f32.gmra.mxu0 %v1017
    %v1490 = vpop.f32.mrf.mxu0
    %v1491 = vadd.f32 0.0, %v1490
    %1492 = vmatmul.f32.gmra.mxu0 %v1018
    %v1493 = vpop.f32.mrf.mxu0
    %v1494 = vadd.f32 0.0, %v1493
    %1495 = vmatmul.f32.gmra.mxu0 %v1019
    %v1496 = vpop.f32.mrf.mxu0
    %v1497 = vadd.f32 0.0, %v1496
    %1498 = vmatmul.f32.gmra.mxu0 %v1020
    %v1499 = vpop.f32.mrf.mxu0
    %v1500 = vadd.f32 0.0, %v1499
    %1501 = vmatmul.f32.gmra.mxu0 %v1021
    %v1502 = vpop.f32.mrf.mxu0
    %v1503 = vadd.f32 0.0, %v1502
    %1504 = vdwg.mxu0
    %1505 = vst [vmem:[#allocation2] sm:$0xff] %v1152
    %1506 = vst [vmem:[#allocation2 + $0x8] sm:$0xff] %v1205
    %1507 = vst [vmem:[#allocation2 + $0x10] sm:$0xff] %v1258
    %1508 = vst [vmem:[#allocation2 + $0x18] sm:$0xff] %v1311
    %1509 = vst [vmem:[#allocation2 + $0x20] sm:$0xff] %v1364
    %1510 = vst [vmem:[#allocation2 + $0x28] sm:$0xff] %v1417
    %1511 = vst.msk [vmem:[#allocation2 + $0x30] sm:$0xff] %vm206, %v1470
    %1512 = vst [vmem:[#allocation2 + $0x38] sm:$0xff] %v1155
    %1513 = vst [vmem:[#allocation2 + $0x40] sm:$0xff] %v1208
    %1514 = vst [vmem:[#allocation2 + $0x48] sm:$0xff] %v1261
    %1515 = vst [vmem:[#allocation2 + $0x50] sm:$0xff] %v1314
    %1516 = vst [vmem:[#allocation2 + $0x58] sm:$0xff] %v1367
    %1517 = vst [vmem:[#allocation2 + $0x60] sm:$0xff] %v1420
    %1518 = vst.msk [vmem:[#allocation2 + $0x68] sm:$0xff] %vm206, %v1473
    %1519 = vst [vmem:[#allocation2 + $0x70] sm:$0xff] %v1158
    %1520 = vst [vmem:[#allocation2 + $0x78] sm:$0xff] %v1211
    %1521 = vst [vmem:[#allocation2 + $0x80] sm:$0xff] %v1264
    %1522 = vst [vmem:[#allocation2 + $0x88] sm:$0xff] %v1317
    %1523 = vst [vmem:[#allocation2 + $0x90] sm:$0xff] %v1370
    %1524 = vst [vmem:[#allocation2 + $0x98] sm:$0xff] %v1423
    %1525 = vst.msk [vmem:[#allocation2 + $0xa0] sm:$0xff] %vm206, %v1476
    %1526 = vst [vmem:[#allocation2 + $0xa8] sm:$0xff] %v1161
    %1527 = vst [vmem:[#allocation2 + $0xb0] sm:$0xff] %v1214
    %1528 = vst [vmem:[#allocation2 + $0xb8] sm:$0xff] %v1267
    %1529 = vst [vmem:[#allocation2 + $0xc0] sm:$0xff] %v1320
    %1530 = vst [vmem:[#allocation2 + $0xc8] sm:$0xff] %v1373
    %1531 = vst [vmem:[#allocation2 + $0xd0] sm:$0xff] %v1426
    %1532 = vst.msk [vmem:[#allocation2 + $0xd8] sm:$0xff] %vm206, %v1479
    %1533 = vst [vmem:[#allocation2 + $0xe0] sm:$0xff] %v1164
    %1534 = vst [vmem:[#allocation2 + $0xe8] sm:$0xff] %v1217
    %1535 = vst [vmem:[#allocation2 + $0xf0] sm:$0xff] %v1270
    %1536 = vst [vmem:[#allocation2 + $0xf8] sm:$0xff] %v1323
    %1537 = vst [vmem:[#allocation2 + $0x100] sm:$0xff] %v1376
    %1538 = vst [vmem:[#allocation2 + $0x108] sm:$0xff] %v1429
    %1539 = vst.msk [vmem:[#allocation2 + $0x110] sm:$0xff] %vm206, %v1482
    %1540 = vst [vmem:[#allocation2 + $0x118] sm:$0xff] %v1167
    %1541 = vst [vmem:[#allocation2 + $0x120] sm:$0xff] %v1220
    %1542 = vst [vmem:[#allocation2 + $0x128] sm:$0xff] %v1273
    %1543 = vst [vmem:[#allocation2 + $0x130] sm:$0xff] %v1326
    %1544 = vst [vmem:[#allocation2 + $0x138] sm:$0xff] %v1379
    %1545 = vst [vmem:[#allocation2 + $0x140] sm:$0xff] %v1432
    %1546 = vst.msk [vmem:[#allocation2 + $0x148] sm:$0xff] %vm206, %v1485
    %1547 = vst [vmem:[#allocation2 + $0x150] sm:$0xff] %v1170
    %1548 = vst [vmem:[#allocation2 + $0x158] sm:$0xff] %v1223
    %1549 = vst [vmem:[#allocation2 + $0x160] sm:$0xff] %v1276
    %1550 = vst [vmem:[#allocation2 + $0x168] sm:$0xff] %v1329
    %1551 = vst [vmem:[#allocation2 + $0x170] sm:$0xff] %v1382
    %1552 = vst [vmem:[#allocation2 + $0x178] sm:$0xff] %v1435
    %1553 = vst.msk [vmem:[#allocation2 + $0x180] sm:$0xff] %vm206, %v1488
    %1554 = vst [vmem:[#allocation2 + $0x188] sm:$0xff] %v1173
    %1555 = vst [vmem:[#allocation2 + $0x190] sm:$0xff] %v1226
    %1556 = vst [vmem:[#allocation2 + $0x198] sm:$0xff] %v1279
    %1557 = vst [vmem:[#allocation2 + $0x1a0] sm:$0xff] %v1332
    %1558 = vst [vmem:[#allocation2 + $0x1a8] sm:$0xff] %v1385
    %1559 = vst [vmem:[#allocation2 + $0x1b0] sm:$0xff] %v1438
    %1560 = vst.msk [vmem:[#allocation2 + $0x1b8] sm:$0xff] %vm206, %v1491
    %1561 = vst [vmem:[#allocation2 + $0x1c0] sm:$0xff] %v1176
    %1562 = vst [vmem:[#allocation2 + $0x1c8] sm:$0xff] %v1229
    %1563 = vst [vmem:[#allocation2 + $0x1d0] sm:$0xff] %v1282
    %1564 = vst [vmem:[#allocation2 + $0x1d8] sm:$0xff] %v1335
    %1565 = vst [vmem:[#allocation2 + $0x1e0] sm:$0xff] %v1388
    %1566 = vst [vmem:[#allocation2 + $0x1e8] sm:$0xff] %v1441
    %1567 = vst.msk [vmem:[#allocation2 + $0x1f0] sm:$0xff] %vm206, %v1494
    %1568 = vst [vmem:[#allocation2 + $0x1f8] sm:$0xff] %v1179
    %1569 = vst [vmem:[#allocation2 + $0x200] sm:$0xff] %v1232
    %1570 = vst [vmem:[#allocation2 + $0x208] sm:$0xff] %v1285
    %1571 = vst [vmem:[#allocation2 + $0x210] sm:$0xff] %v1338
    %1572 = vst [vmem:[#allocation2 + $0x218] sm:$0xff] %v1391
    %1573 = vst [vmem:[#allocation2 + $0x220] sm:$0xff] %v1444
    %1574 = vst.msk [vmem:[#allocation2 + $0x228] sm:$0xff] %vm206, %v1497
    %1575 = vst [vmem:[#allocation2 + $0x230] sm:$0xff] %v1182
    %1576 = vst [vmem:[#allocation2 + $0x238] sm:$0xff] %v1235
    %1577 = vst [vmem:[#allocation2 + $0x240] sm:$0xff] %v1288
    %1578 = vst [vmem:[#allocation2 + $0x248] sm:$0xff] %v1341
    %1579 = vst [vmem:[#allocation2 + $0x250] sm:$0xff] %v1394
    %1580 = vst [vmem:[#allocation2 + $0x258] sm:$0xff] %v1447
    %1581 = vst.msk [vmem:[#allocation2 + $0x260] sm:$0xff] %vm206, %v1500
    %1582 = vst [vmem:[#allocation2 + $0x268] sm:$0xff] %v1185
    %1583 = vst [vmem:[#allocation2 + $0x270] sm:$0xff] %v1238
    %1584 = vst [vmem:[#allocation2 + $0x278] sm:$0xff] %v1291
    %1585 = vst [vmem:[#allocation2 + $0x280] sm:$0xff] %v1344
    %1586 = vst [vmem:[#allocation2 + $0x288] sm:$0xff] %v1397
    %1587 = vst [vmem:[#allocation2 + $0x290] sm:$0xff] %v1450
    %1588 = vst.msk [vmem:[#allocation2 + $0x298] sm:$0xff] %vm206, %v1503
    // Predicated region
    $region26: #{tpu_custom_call.1} parent=1 // pred_check
      _
    $region27: #{tpu_custom_call.1} parent=1 // pred_check_branch
      %1590 = sbr.rel (0) target = $region29
    $region28: #{tpu_custom_call.1} parent=1 // pred_region
      %1592 = vsyncadd [#allocation3], 0
      %s1593 = sshll.u32 [#allocation2], 4
      %s1594 = int_to_ptr.vmem [resolvable:$true] %s1593
      %s1595 = sshll.u32 %s6, 4
      %s1596 = int_to_ptr.hbm [resolvable:$true] %s1595
      %1601 = dma.vmem_to_hbm [thread:$0]  %s1594, 10752, %s1596, [#allocation3], 896, 896, 56
    $region29: #{tpu_custom_call.1} parent=1 // pred_fallthru
      _
    // Predicated region
    $region30: #{tpu_custom_call.1} parent=1 // pred_check
      _
    $region31: #{tpu_custom_call.1} parent=1 // pred_check_branch
      %1603 = sbr.rel (0) target = $region33
    $region32: #{tpu_custom_call.1} parent=1 // pred_region
      %1605 = dma.done [#allocation3], 10752
    $region33: #{tpu_custom_call.1} parent=1 // pred_fallthru
      _
    %1606 = vsyncpa [#allocation3], 1

</llo_original>
